<compile_context>
chip_gen: v6e
topology: v6e:2x2x1
jax: 0.10.0
libtpu: 0.0.40
codegen_flags: <defaults>
</compile_context>

<pallas_src>
import jax
import jax.numpy as jnp
from jax.experimental import pallas as pl
from jax.experimental.pallas import tpu as pltpu

_SQRT_2_OVER_PI = 0.7978845608028654  # sqrt(2/pi)


def _gelu_tanh(x):
    # GELU (tanh approximation), f32 elementwise (tanh goes to the EUP slot).
    x3 = x * x * x
    return 0.5 * x * (1.0 + jnp.tanh(_SQRT_2_OVER_PI * (x + 0.044715 * x3)))


def ffn_kernel(x_ref, w1_ref, b1_ref, w2_ref, b2_ref, o_ref, acc_ref):
    # x_ref:  (tm, E)   bf16 token tile
    # w1_ref: (E, th)   bf16 first-layer weight tile (hidden slice)
    # b1_ref: (1, th)   f32 first-layer bias slice
    # w2_ref: (th, E)   bf16 second-layer weight tile (hidden slice)
    # b2_ref: (1, E)    f32 second-layer bias
    # o_ref:  (tm, E)   output tile (input dtype)
    # acc_ref:(tm, E)   f32 VMEM accumulator (persists across the h axis)
    h_idx = pl.program_id(1)

    @pl.when(h_idx == 0)
    def _():
        acc_ref[...] = jnp.zeros_like(acc_ref)

    # First matmul on the MXU: bf16 x bf16 -> f32 accumulate.
    h = jnp.dot(x_ref[...], w1_ref[...], preferred_element_type=jnp.float32)
    h = h + b1_ref[...]          # bias + GELU in f32
    g = _gelu_tanh(h)

    # Second matmul, accumulated over hidden tiles in f32 scratch.
    acc_ref[...] += jnp.dot(g.astype(w2_ref.dtype), w2_ref[...],
                            preferred_element_type=jnp.float32)

    @pl.when(h_idx == pl.num_programs(1) - 1)
    def _():
        o_ref[...] = (acc_ref[...] + b2_ref[...]).astype(o_ref.dtype)


def _pick_hidden_tile(H):
    for th in (512, 256, 128):
        if H % th == 0:
            return th
    return H  # tiny / odd hidden sizes: take the whole thing


def feed_forward(x, w1, b1, w2, b2, *, tm=128, th=None):
    """x: (batch, seq, E); w1: (E, 4E); b1: (4E,); w2: (4E, E); b2: (E,)."""
    B, S, E = x.shape
    H = w1.shape[1]
    M = B * S

    if th is None:
        th = _pick_hidden_tile(H)
    assert H % th == 0, "hidden dim must be divisible by the hidden tile"

    # Pad token rows so they tile cleanly; padded rows are computed and discarded.
    M_pad = ((M + tm - 1) // tm) * tm
    x2d = x.reshape(M, E)
    if M_pad != M:
        x2d = jnp.pad(x2d, ((0, M_pad - M), (0, 0)))

    out_dtype = x.dtype

    # bf16 matmul operands (MXU-native); biases stay f32.
    x2d_b = x2d.astype(jnp.bfloat16)
    w1_b = w1.astype(jnp.bfloat16)
    w2_b = w2.astype(jnp.bfloat16)
    b1_f = b1.reshape(1, H).astype(jnp.float32)
    b2_f = b2.reshape(1, E).astype(jnp.float32)

    grid = (M_pad // tm, H // th)

    cost = pl.CostEstimate(
        flops=4 * M_pad * E * H,                 # two matmuls: 2*M*E*H each
        transcendentals=M_pad * H,               # tanh in GELU
        bytes_accessed=(x2d_b.size * 2 + w1_b.size * 2 + w2_b.size * 2
                        + b1_f.size * 4 + b2_f.size * 4
                        + M_pad * E * jnp.dtype(out_dtype).itemsize),
    )

    out = pl.pallas_call(
        ffn_kernel,
        out_shape=jax.ShapeDtypeStruct((M_pad, E), out_dtype),
        grid_spec=pltpu.PrefetchScalarGridSpec(
            num_scalar_prefetch=0,
            grid=grid,
            in_specs=[
                pl.BlockSpec((tm, E), lambda i, h: (i, 0)),   # x tile
                pl.BlockSpec((E, th), lambda i, h: (0, h)),   # W1 hidden slice
                pl.BlockSpec((1, th), lambda i, h: (0, h)),   # b1 hidden slice
                pl.BlockSpec((th, E), lambda i, h: (h, 0)),   # W2 hidden slice
                pl.BlockSpec((1, E), lambda i, h: (0, 0)),    # b2 (invariant)
            ],
            out_specs=pl.BlockSpec((tm, E), lambda i, h: (i, 0)),
            scratch_shapes=[pltpu.VMEM((tm, E), jnp.float32)],
        ),
        compiler_params=pltpu.CompilerParams(
            dimension_semantics=("parallel", "arbitrary")),
        cost_estimate=cost,
    )(x2d_b, w1_b, b1_f, w2_b, b2_f)

    out = out[:M]
    return out.reshape(B, S, E)


if __name__ == "__main__":
    # config['emb_dim'] = 128 -> hidden = 4 * 128 = 512
    batch, seq, emb_dim = 2, 8, 128
    hidden = 4 * emb_dim

    key = jax.random.PRNGKey(0)
    kx, kw1, kb1, kw2, kb2 = jax.random.split(key, 5)

    x = jax.random.normal(kx, (batch, seq, emb_dim), dtype=jnp.float32)
    # Deterministic parameter init (analogue of nn.Linear's uniform init).
    w1 = jax.random.uniform(kw1, (emb_dim, hidden), dtype=jnp.float32,
                            minval=-1.0, maxval=1.0) / jnp.sqrt(emb_dim)
    b1 = jax.random.uniform(kb1, (hidden,), dtype=jnp.float32,
                            minval=-1.0, maxval=1.0) / jnp.sqrt(emb_dim)
    w2 = jax.random.uniform(kw2, (hidden, emb_dim), dtype=jnp.float32,
                            minval=-1.0, maxval=1.0) / jnp.sqrt(hidden)
    b2 = jax.random.uniform(kb2, (emb_dim,), dtype=jnp.float32,
                            minval=-1.0, maxval=1.0) / jnp.sqrt(hidden)

    out = feed_forward(x, w1, b1, w2, b2)
    out = jax.block_until_ready(out)

    # Pure-JAX reference with the same bf16 operand rounding (f32 accumulate),
    # so the tolerance only has to absorb accumulation-order differences.
    def rt(a):
        return a.astype(jnp.bfloat16).astype(jnp.float32)

    h_ref = rt(x).reshape(-1, emb_dim) @ rt(w1) + b1
    g_ref = 0.5 * h_ref * (1.0 + jnp.tanh(_SQRT_2_OVER_PI
                                          * (h_ref + 0.044715 * h_ref ** 3)))
    y_ref = (rt(g_ref) @ rt(w2) + b2).reshape(batch, seq, emb_dim)

    assert jnp.allclose(out, y_ref, atol=2e-2, rtol=2e-2), "mismatch vs reference"

    print("KERNEL_OK")
</pallas_src>

<mosaic_0001>
module attributes {stable_mosaic.version = 11 : i64} {
  func.func @ffn_kernel(%arg0: i32, %arg1: i32, %arg2: memref<128x128xbf16, #tpu.memory_space<vmem>>, %arg3: memref<128x512xbf16, #tpu.memory_space<vmem>>, %arg4: memref<1x512xf32, #tpu.memory_space<vmem>>, %arg5: memref<512x128xbf16, #tpu.memory_space<vmem>>, %arg6: memref<1x128xf32, #tpu.memory_space<vmem>>, %arg7: memref<128x128xf32, #tpu.memory_space<vmem>>, %arg8: memref<128x128xf32, #tpu.memory_space<vmem>>) attributes {dimension_semantics = [#tpu.dimension_semantics<parallel>, #tpu.dimension_semantics<arbitrary>], iteration_bounds = array<i64: 1, 1>, scalar_prefetch = 0 : i64, scratch_operands = 1 : i64, tpu.core_type = #tpu.core_type<tc>, window_params = [{transform_indices = @transform_0, window_bounds = array<i64: 128, 128>}, {transform_indices = @transform_1, window_bounds = array<i64: 128, 512>}, {transform_indices = @transform_2, window_bounds = array<i64: 1, 512>}, {transform_indices = @transform_3, window_bounds = array<i64: 512, 128>}, {pipeline_mode = #tpu.pipeline_mode<synchronous>, transform_indices = @transform_4, window_bounds = array<i64: 1, 128>}, {transform_indices = @transform_5, window_bounds = array<i64: 128, 128>}]} {
    %c0_i32 = arith.constant 0 : i32
    %0 = arith.cmpi eq, %arg1, %c0_i32 : i32
    %1 = arith.extui %0 : i1 to i32
    %c0_i32_0 = arith.constant 0 : i32
    %2 = arith.cmpi ne, %1, %c0_i32_0 : i32
    scf.if %2 {
      %cst_19 = arith.constant 0.000000e+00 : f32
      %31 = vector.broadcast %cst_19 : f32 to vector<128x128xf32>
      %c0_20 = arith.constant 0 : index
      %c0_21 = arith.constant 0 : index
      %32 = vector.load %arg8[%c0_20, %c0_21] : memref<128x128xf32, #tpu.memory_space<vmem>>, vector<128x128xf32>
      tpu.vector_store %arg8[%c0_20, %c0_21], %31 {strides = array<i32>} : memref<128x128xf32, #tpu.memory_space<vmem>>, vector<128x128xf32>,
    } else {
    }
    %c0 = arith.constant 0 : index
    %c0_1 = arith.constant 0 : index
    %3 = vector.load %arg2[%c0, %c0_1] : memref<128x128xbf16, #tpu.memory_space<vmem>>, vector<128x128xbf16>
    %c0_2 = arith.constant 0 : index
    %c0_3 = arith.constant 0 : index
    %4 = vector.load %arg3[%c0_2, %c0_3] : memref<128x512xbf16, #tpu.memory_space<vmem>>, vector<128x512xbf16>
    %cst = arith.constant dense<0.000000e+00> : vector<128x512xf32>
    %5 = tpu.matmul %3, %4, %cst {dimension_numbers = #tpu.dot_dimension_numbers<[1], [0], [0], [1], [0, 0, 1, 1], [], []>} : vector<128x128xbf16>, vector<128x512xbf16>, vector<128x512xf32> -> vector<128x512xf32>
    %c0_4 = arith.constant 0 : index
    %c0_5 = arith.constant 0 : index
    %6 = vector.load %arg4[%c0_4, %c0_5] : memref<1x512xf32, #tpu.memory_space<vmem>>, vector<1x512xf32>
    %7 = vector.broadcast %6 : vector<1x512xf32> to vector<128x512xf32>
    %8 = arith.addf %5, %7 : vector<128x512xf32>
    %9 = arith.mulf %8, %8 : vector<128x512xf32>
    %10 = arith.mulf %9, %8 : vector<128x512xf32>
    %cst_6 = arith.constant 5.000000e-01 : f32
    %11 = vector.broadcast %cst_6 : f32 to vector<128x512xf32>
    %12 = arith.mulf %11, %8 : vector<128x512xf32>
    %cst_7 = arith.constant 4.471500e-02 : f32
    %13 = vector.broadcast %cst_7 : f32 to vector<128x512xf32>
    %14 = arith.mulf %13, %10 : vector<128x512xf32>
    %15 = arith.addf %8, %14 : vector<128x512xf32>
    %cst_8 = arith.constant 0.797884583 : f32
    %16 = vector.broadcast %cst_8 : f32 to vector<128x512xf32>
    %17 = arith.mulf %16, %15 : vector<128x512xf32>
    %18 = math.tanh %17 : vector<128x512xf32>
    %cst_9 = arith.constant 1.000000e+00 : f32
    %19 = vector.broadcast %cst_9 : f32 to vector<128x512xf32>
    %20 = arith.addf %19, %18 : vector<128x512xf32>
    %21 = arith.mulf %12, %20 : vector<128x512xf32>
    %c0_10 = arith.constant 0 : index
    %c0_11 = arith.constant 0 : index
    %22 = vector.load %arg8[%c0_10, %c0_11] : memref<128x128xf32, #tpu.memory_space<vmem>>, vector<128x128xf32>
    %23 = arith.truncf %21 : vector<128x512xf32> to vector<128x512xbf16>
    %c0_12 = arith.constant 0 : index
    %c0_13 = arith.constant 0 : index
    %24 = vector.load %arg5[%c0_12, %c0_13] : memref<512x128xbf16, #tpu.memory_space<vmem>>, vector<512x128xbf16>
    %cst_14 = arith.constant dense<0.000000e+00> : vector<128x128xf32>
    %25 = tpu.matmul %23, %24, %cst_14 {dimension_numbers = #tpu.dot_dimension_numbers<[1], [0], [0], [1], [0, 0, 1, 1], [], []>} : vector<128x512xbf16>, vector<512x128xbf16>, vector<128x128xf32> -> vector<128x128xf32>
    %26 = arith.addf %22, %25 : vector<128x128xf32>
    %c0_15 = arith.constant 0 : index
    %c0_16 = arith.constant 0 : index
    %27 = vector.load %arg8[%c0_15, %c0_16] : memref<128x128xf32, #tpu.memory_space<vmem>>, vector<128x128xf32>
    tpu.vector_store %arg8[%c0_15, %c0_16], %26 {strides = array<i32>} : memref<128x128xf32, #tpu.memory_space<vmem>>, vector<128x128xf32>,
    %c0_i32_17 = arith.constant 0 : i32
    %28 = arith.cmpi eq, %arg1, %c0_i32_17 : i32
    %29 = arith.extui %28 : i1 to i32
    %c0_i32_18 = arith.constant 0 : i32
    %30 = arith.cmpi ne, %29, %c0_i32_18 : i32
    scf.if %30 {
      %c0_19 = arith.constant 0 : index
      %c0_20 = arith.constant 0 : index
      %31 = vector.load %arg8[%c0_19, %c0_20] : memref<128x128xf32, #tpu.memory_space<vmem>>, vector<128x128xf32>
      %c0_21 = arith.constant 0 : index
      %c0_22 = arith.constant 0 : index
      %32 = vector.load %arg6[%c0_21, %c0_22] : memref<1x128xf32, #tpu.memory_space<vmem>>, vector<1x128xf32>
      %33 = vector.broadcast %32 : vector<1x128xf32> to vector<128x128xf32>
      %34 = arith.addf %31, %33 : vector<128x128xf32>
      %c0_23 = arith.constant 0 : index
      %c0_24 = arith.constant 0 : index
      %35 = vector.load %arg7[%c0_23, %c0_24] : memref<128x128xf32, #tpu.memory_space<vmem>>, vector<128x128xf32>
      tpu.vector_store %arg7[%c0_23, %c0_24], %34 {strides = array<i32>} : memref<128x128xf32, #tpu.memory_space<vmem>>, vector<128x128xf32>,
    } else {
    }
    return
  }
  func.func @transform_0(%arg0: i32, %arg1: i32) -> (i32, i32) {
    %c0_i32 = arith.constant 0 : i32
    %c0_i32_0 = arith.constant 0 : i32
    return %arg0, %c0_i32 : i32, i32
  }
  func.func @transform_1(%arg0: i32, %arg1: i32) -> (i32, i32) {
    %c0_i32 = arith.constant 0 : i32
    %c0_i32_0 = arith.constant 0 : i32
    return %c0_i32, %arg1 : i32, i32
  }
  func.func @transform_2(%arg0: i32, %arg1: i32) -> (i32, i32) {
    %c0_i32 = arith.constant 0 : i32
    %c0_i32_0 = arith.constant 0 : i32
    return %c0_i32, %arg1 : i32, i32
  }
  func.func @transform_3(%arg0: i32, %arg1: i32) -> (i32, i32) {
    %c0_i32 = arith.constant 0 : i32
    %c0_i32_0 = arith.constant 0 : i32
    return %arg1, %c0_i32 : i32, i32
  }
  func.func @transform_4(%arg0: i32, %arg1: i32) -> (i32, i32) {
    %c0_i32 = arith.constant 0 : i32
    %c0_i32_0 = arith.constant 0 : i32
    %c0_i32_1 = arith.constant 0 : i32
    return %c0_i32, %c0_i32_0 : i32, i32
  }
  func.func @transform_5(%arg0: i32, %arg1: i32) -> (i32, i32) {
    %c0_i32 = arith.constant 0 : i32
    %c0_i32_0 = arith.constant 0 : i32
    return %arg0, %c0_i32 : i32, i32
  }
}

</mosaic_0001>

<llo_original>
// kernel: tpu_custom_call.1
$region0: #{tpu_custom_call.1}
  #allocation0 [shape = 'u32[]', space=smem, size = 0x4, offset = 0x4, fixed_abs, tag = 'smem constant byte address 0x4 - core index']
  #allocation1 [shape = 'u32[144,128]{1,0:T(1,128)}', space=vmem, size = 0x12000, scoped, tag = 'internal scratch']
  #allocation2 [shape = 'f32[128,128]{1,0:T(8,128)}', space=vmem, size = 0x10000, scoped, tag = 'scratch operand']
  %s0 = inlined_call_operand.hbm [shape: bf16[128,128], index: 0, kind: input, shape index: {}]
  %s1 = inlined_call_operand.hbm [shape: bf16[128,512], index: 1, kind: input, shape index: {}]
  %s2 = inlined_call_operand.hbm [shape: f32[1,512], index: 2, kind: input, shape index: {}]
  %s3 = inlined_call_operand.hbm [shape: bf16[512,128], index: 3, kind: input, shape index: {}]
  %s4 = inlined_call_operand.vmem [shape: f32[1,128], index: 4, kind: input, shape index: {}]
  %s5 = inlined_call_operand.hbm [shape: f32[128,128], index: 5, kind: output, shape index: {}]
  %s6 = sld [smem:[#allocation0]]
  $region54: #{tpu_custom_call.1} parent=0
    _
  %s8 = ssub.s32 1, %s6
  %s9 = scalar_select 0, %s8, %s6
  $region1: #{tpu_custom_call.1} parent=0
    #allocation3 [shape = 'u8[32768]{0}', space=vmem, size = 0x8000, scoped, tag = 'input window, operand 0, single buffered']
    #allocation4 [shape = 's32[1]{0}', space=sflag, size = 0x4, scoped, tag = 'scoped memory for tpu_custom_call.1']
    #allocation5 [shape = 's32[1]{0}', space=sflag, size = 0x4, scoped, tag = 'scoped memory for tpu_custom_call.1']
    #allocation6 [shape = 'u8[131072]{0}', space=vmem, size = 0x20000, scoped, tag = 'input window, operand 1, single buffered']
    #allocation7 [shape = 's32[1]{0}', space=sflag, size = 0x4, scoped, tag = 'scoped memory for tpu_custom_call.1']
    #allocation8 [shape = 'u8[2048]{0}', space=vmem, size = 0x800, scoped, tag = 'input window, operand 2, single buffered']
    #allocation9 [shape = 'u8[131072]{0}', space=vmem, size = 0x20000, scoped, tag = 'input window, operand 3, single buffered']
    #allocation10 [shape = 's32[1]{0}', space=sflag, size = 0x4, scoped, tag = 'scoped memory for tpu_custom_call.1']
    #allocation11 [shape = 'u8[65536]{0}', space=vmem, size = 0x10000, scoped, tag = 'output window, operand 0, single buffered']
    %10 = vsyncpa [#allocation4], 0
    %11 = vsyncpa [#allocation7], 0
    %12 = vsyncpa [#allocation10], 0
    %13 = vsyncpa [#allocation5], 0
    // Predicated region
    $region2: #{tpu_custom_call.1} parent=1 // pred_check
      _
    $region3: #{tpu_custom_call.1} parent=1 // pred_check_branch
      %15 = sbr.rel (0) target = $region5
    $region4: #{tpu_custom_call.1} parent=1 // pred_region
      %s17 = ssub.s32 1024, 1024
      %18 = vsyncadd [#allocation4], %s17
      %s19 = sshll.u32 [#allocation3], 4
      %s20 = int_to_ptr.vmem [resolvable:$true] %s19
      %25 = dma.hbm_to_vmem [thread:$0]  %s0, 1024, %s20, [#allocation4], 64, 64, 4
    $region5: #{tpu_custom_call.1} parent=1 // pred_fallthru
      _
    // Predicated region
    $region6: #{tpu_custom_call.1} parent=1 // pred_check
      _
    $region7: #{tpu_custom_call.1} parent=1 // pred_check_branch
      %27 = sbr.rel (0) target = $region9
    $region8: #{tpu_custom_call.1} parent=1 // pred_region
      %s29 = ssub.s32 4096, 4096
      %30 = vsyncadd [#allocation7], %s29
      %s31 = sshll.u32 [#allocation6], 4
      %s32 = int_to_ptr.vmem [resolvable:$true] %s31
      %37 = dma.hbm_to_vmem [thread:$0]  %s1, 4096, %s32, [#allocation7], 256, 256, 16
    $region9: #{tpu_custom_call.1} parent=1 // pred_fallthru
      _
    // Predicated region
    $region10: #{tpu_custom_call.1} parent=1 // pred_check
      _
    $region11: #{tpu_custom_call.1} parent=1 // pred_check_branch
      %39 = sbr.rel (0) target = $region13
    $region12: #{tpu_custom_call.1} parent=1 // pred_region
      %s41 = ssub.s32 64, 64
      %42 = vsyncadd [#allocation7], %s41
      %s44 = sshll.u32 [#allocation8], 4
      %s45 = int_to_ptr.vmem [resolvable:$true] %s44
      %47 = dma.hbm_to_vmem [thread:$0]  %s2, 64, %s45, [#allocation7]
    $region13: #{tpu_custom_call.1} parent=1 // pred_fallthru
      _
    // Predicated region
    $region14: #{tpu_custom_call.1} parent=1 // pred_check
      _
    $region15: #{tpu_custom_call.1} parent=1 // pred_check_branch
      %49 = sbr.rel (0) target = $region17
    $region16: #{tpu_custom_call.1} parent=1 // pred_region
      %s51 = ssub.s32 4096, 4096
      %52 = vsyncadd [#allocation10], %s51
      %s53 = sshll.u32 [#allocation9], 4
      %s54 = int_to_ptr.vmem [resolvable:$true] %s53
      %59 = dma.hbm_to_vmem [thread:$0]  %s3, 4096, %s54, [#allocation10], 64, 64, 4
    $region17: #{tpu_custom_call.1} parent=1 // pred_fallthru
      _
    // Predicated region
    $region18: #{tpu_custom_call.1} parent=1 // pred_check
      _
    $region19: #{tpu_custom_call.1} parent=1 // pred_check_branch
      %61 = sbr.rel (0) target = $region21
    $region20: #{tpu_custom_call.1} parent=1 // pred_region
      _
    $region21: #{tpu_custom_call.1} parent=1 // pred_fallthru
      _
    // Predicated region
    $region22: #{tpu_custom_call.1} parent=1 // pred_check
      _
    $region23: #{tpu_custom_call.1} parent=1 // pred_check_branch
      %63 = sbr.rel (0) target = $region25
    $region24: #{tpu_custom_call.1} parent=1 // pred_region
      %64 = dma.done [#allocation4], 1024
    $region25: #{tpu_custom_call.1} parent=1 // pred_fallthru
      _
    // Predicated region
    $region26: #{tpu_custom_call.1} parent=1 // pred_check
      _
    $region27: #{tpu_custom_call.1} parent=1 // pred_check_branch
      %66 = sbr.rel (0) target = $region29
    $region28: #{tpu_custom_call.1} parent=1 // pred_region
      %67 = dma.done [#allocation7], 4096
    $region29: #{tpu_custom_call.1} parent=1 // pred_fallthru
      _
    // Predicated region
    $region30: #{tpu_custom_call.1} parent=1 // pred_check
      _
    $region31: #{tpu_custom_call.1} parent=1 // pred_check_branch
      %69 = sbr.rel (0) target = $region33
    $region32: #{tpu_custom_call.1} parent=1 // pred_region
      %70 = dma.done [#allocation7], 64
    $region33: #{tpu_custom_call.1} parent=1 // pred_fallthru
      _
    // Predicated region
    $region34: #{tpu_custom_call.1} parent=1 // pred_check
      _
    $region35: #{tpu_custom_call.1} parent=1 // pred_check_branch
      %72 = sbr.rel (0) target = $region37
    $region36: #{tpu_custom_call.1} parent=1 // pred_region
      %73 = dma.done [#allocation10], 4096
    $region37: #{tpu_custom_call.1} parent=1 // pred_fallthru
      _
    %p75 = scmp.eq.s32.totalorder 0, 0
    // Predicated region
    $region38: #{tpu_custom_call.1} parent=1 // pred_check
      %p76 = pneg %p75
    $region39: #{tpu_custom_call.1} parent=1 // pred_check_branch
      %78 = sbr.rel (%p76) target = $region41
    $region40: #{tpu_custom_call.1} parent=1 // pred_region
      %79 = vst [vmem:[#allocation2] sm:$0xff] 0.0
      %80 = vst [vmem:[#allocation2 + $0x8] sm:$0xff] 0.0
      %81 = vst [vmem:[#allocation2 + $0x10] sm:$0xff] 0.0
      %82 = vst [vmem:[#allocation2 + $0x18] sm:$0xff] 0.0
      %83 = vst [vmem:[#allocation2 + $0x20] sm:$0xff] 0.0
      %84 = vst [vmem:[#allocation2 + $0x28] sm:$0xff] 0.0
      %85 = vst [vmem:[#allocation2 + $0x30] sm:$0xff] 0.0
      %86 = vst [vmem:[#allocation2 + $0x38] sm:$0xff] 0.0
      %87 = vst [vmem:[#allocation2 + $0x40] sm:$0xff] 0.0
      %88 = vst [vmem:[#allocation2 + $0x48] sm:$0xff] 0.0
      %89 = vst [vmem:[#allocation2 + $0x50] sm:$0xff] 0.0
      %90 = vst [vmem:[#allocation2 + $0x58] sm:$0xff] 0.0
      %91 = vst [vmem:[#allocation2 + $0x60] sm:$0xff] 0.0
      %92 = vst [vmem:[#allocation2 + $0x68] sm:$0xff] 0.0
      %93 = vst [vmem:[#allocation2 + $0x70] sm:$0xff] 0.0
      %94 = vst [vmem:[#allocation2 + $0x78] sm:$0xff] 0.0
    $region41: #{tpu_custom_call.1} parent=1 // pred_fallthru
      _
    %v95 = vld [vmem:[#allocation3] sm:$0xf]
    %v96 = vld [vmem:[#allocation3 + $0x4] sm:$0xf]
    %v97 = vld [vmem:[#allocation3 + $0x8] sm:$0xf]
    %v98 = vld [vmem:[#allocation3 + $0xc] sm:$0xf]
    %v99 = vld [vmem:[#allocation3 + $0x10] sm:$0xf]
    %v100 = vld [vmem:[#allocation3 + $0x14] sm:$0xf]
    %v101 = vld [vmem:[#allocation3 + $0x18] sm:$0xf]
    %v102 = vld [vmem:[#allocation3 + $0x1c] sm:$0xf]
    %v103 = vld [vmem:[#allocation3 + $0x20] sm:$0xf]
    %v104 = vld [vmem:[#allocation3 + $0x24] sm:$0xf]
    %v105 = vld [vmem:[#allocation3 + $0x28] sm:$0xf]
    %v106 = vld [vmem:[#allocation3 + $0x2c] sm:$0xf]
    %v107 = vld [vmem:[#allocation3 + $0x30] sm:$0xf]
    %v108 = vld [vmem:[#allocation3 + $0x34] sm:$0xf]
    %v109 = vld [vmem:[#allocation3 + $0x38] sm:$0xf]
    %v110 = vld [vmem:[#allocation3 + $0x3c] sm:$0xf]
    %v111 = vld [vmem:[#allocation6] sm:$0xff]
    %v112 = vld [vmem:[#allocation6 + $0x8] sm:$0xff]
    %v113 = vld [vmem:[#allocation6 + $0x10] sm:$0xff]
    %v114 = vld [vmem:[#allocation6 + $0x18] sm:$0xff]
    %v115 = vld [vmem:[#allocation6 + $0x20] sm:$0xff]
    %v116 = vld [vmem:[#allocation6 + $0x28] sm:$0xff]
    %v117 = vld [vmem:[#allocation6 + $0x30] sm:$0xff]
    %v118 = vld [vmem:[#allocation6 + $0x38] sm:$0xff]
    %v119 = vld [vmem:[#allocation6 + $0x40] sm:$0xff]
    %v120 = vld [vmem:[#allocation6 + $0x48] sm:$0xff]
    %v121 = vld [vmem:[#allocation6 + $0x50] sm:$0xff]
    %v122 = vld [vmem:[#allocation6 + $0x58] sm:$0xff]
    %v123 = vld [vmem:[#allocation6 + $0x60] sm:$0xff]
    %v124 = vld [vmem:[#allocation6 + $0x68] sm:$0xff]
    %v125 = vld [vmem:[#allocation6 + $0x70] sm:$0xff]
    %v126 = vld [vmem:[#allocation6 + $0x78] sm:$0xff]
    %v127 = vld [vmem:[#allocation6 + $0x80] sm:$0xff]
    %v128 = vld [vmem:[#allocation6 + $0x88] sm:$0xff]
    %v129 = vld [vmem:[#allocation6 + $0x90] sm:$0xff]
    %v130 = vld [vmem:[#allocation6 + $0x98] sm:$0xff]
    %v131 = vld [vmem:[#allocation6 + $0xa0] sm:$0xff]
    %v132 = vld [vmem:[#allocation6 + $0xa8] sm:$0xff]
    %v133 = vld [vmem:[#allocation6 + $0xb0] sm:$0xff]
    %v134 = vld [vmem:[#allocation6 + $0xb8] sm:$0xff]
    %v135 = vld [vmem:[#allocation6 + $0xc0] sm:$0xff]
    %v136 = vld [vmem:[#allocation6 + $0xc8] sm:$0xff]
    %v137 = vld [vmem:[#allocation6 + $0xd0] sm:$0xff]
    %v138 = vld [vmem:[#allocation6 + $0xd8] sm:$0xff]
    %v139 = vld [vmem:[#allocation6 + $0xe0] sm:$0xff]
    %v140 = vld [vmem:[#allocation6 + $0xe8] sm:$0xff]
    %v141 = vld [vmem:[#allocation6 + $0xf0] sm:$0xff]
    %v142 = vld [vmem:[#allocation6 + $0xf8] sm:$0xff]
    %v143 = vld [vmem:[#allocation8] sm:$0xf]
    %v145 = vlaneseq
    %v146 = vshrl.u32 %v145, 7
    %v147 = vsub.s32 0, %v146
    %v148 = vrot.slane %v143, %v147
    %v149 = vlaneseq
    %v150 = vshrl.u32 %v149, 7
    %v151 = vsub.s32 1, %v150
    %v152 = vrot.slane %v143, %v151
    %v153 = vlaneseq
    %v154 = vshrl.u32 %v153, 7
    %v155 = vsub.s32 2, %v154
    %v156 = vrot.slane %v143, %v155
    %v157 = vlaneseq
    %v158 = vshrl.u32 %v157, 7
    %v159 = vsub.s32 3, %v158
    %v160 = vrot.slane %v143, %v159
    %v181 = vunpack.c.l.b16 %v95
    %v182 = vunpack.c.l.b16 %v96
    %v183 = vunpack.c.l.b16 %v97
    %v184 = vunpack.c.l.b16 %v98
    %v185 = vunpack.c.l.b16 %v99
    %v186 = vunpack.c.l.b16 %v100
    %v187 = vunpack.c.l.b16 %v101
    %v188 = vunpack.c.l.b16 %v102
    %v189 = vunpack.c.l.b16 %v103
    %v190 = vunpack.c.l.b16 %v104
    %v191 = vunpack.c.l.b16 %v105
    %v192 = vunpack.c.l.b16 %v106
    %v193 = vunpack.c.l.b16 %v107
    %v194 = vunpack.c.l.b16 %v108
    %v195 = vunpack.c.l.b16 %v109
    %v196 = vunpack.c.l.b16 %v110
    %v197 = vpack.c.b16 %v182, %v181
    %v198 = vpack.c.b16 %v184, %v183
    %v199 = vpack.c.b16 %v186, %v185
    %v200 = vpack.c.b16 %v188, %v187
    %v201 = vpack.c.b16 %v190, %v189
    %v202 = vpack.c.b16 %v192, %v191
    %v203 = vpack.c.b16 %v194, %v193
    %v204 = vpack.c.b16 %v196, %v195
    %v245 = vunpack.c.l.b16 %v111
    %v246 = vunpack.c.h.b16 %v111
    %v247 = vunpack.c.l.b16 %v112
    %v248 = vunpack.c.h.b16 %v112
    %v249 = vunpack.c.l.b16 %v113
    %v250 = vunpack.c.h.b16 %v113
    %v251 = vunpack.c.l.b16 %v114
    %v252 = vunpack.c.h.b16 %v114
    %v253 = vunpack.c.l.b16 %v115
    %v254 = vunpack.c.h.b16 %v115
    %v255 = vunpack.c.l.b16 %v116
    %v256 = vunpack.c.h.b16 %v116
    %v257 = vunpack.c.l.b16 %v117
    %v258 = vunpack.c.h.b16 %v117
    %v259 = vunpack.c.l.b16 %v118
    %v260 = vunpack.c.h.b16 %v118
    %v261 = vunpack.c.l.b16 %v119
    %v262 = vunpack.c.h.b16 %v119
    %v263 = vunpack.c.l.b16 %v120
    %v264 = vunpack.c.h.b16 %v120
    %v265 = vunpack.c.l.b16 %v121
    %v266 = vunpack.c.h.b16 %v121
    %v267 = vunpack.c.l.b16 %v122
    %v268 = vunpack.c.h.b16 %v122
    %v269 = vunpack.c.l.b16 %v123
    %v270 = vunpack.c.h.b16 %v123
    %v271 = vunpack.c.l.b16 %v124
    %v272 = vunpack.c.h.b16 %v124
    %v273 = vunpack.c.l.b16 %v125
    %v274 = vunpack.c.h.b16 %v125
    %v275 = vunpack.c.l.b16 %v126
    %v276 = vunpack.c.h.b16 %v126
    %v277 = vunpack.c.l.b16 %v127
    %v278 = vunpack.c.h.b16 %v127
    %v279 = vunpack.c.l.b16 %v128
    %v280 = vunpack.c.h.b16 %v128
    %v281 = vunpack.c.l.b16 %v129
    %v282 = vunpack.c.h.b16 %v129
    %v283 = vunpack.c.l.b16 %v130
    %v284 = vunpack.c.h.b16 %v130
    %v285 = vunpack.c.l.b16 %v131
    %v286 = vunpack.c.h.b16 %v131
    %v287 = vunpack.c.l.b16 %v132
    %v288 = vunpack.c.h.b16 %v132
    %v289 = vunpack.c.l.b16 %v133
    %v290 = vunpack.c.h.b16 %v133
    %v291 = vunpack.c.l.b16 %v134
    %v292 = vunpack.c.h.b16 %v134
    %v293 = vunpack.c.l.b16 %v135
    %v294 = vunpack.c.h.b16 %v135
    %v295 = vunpack.c.l.b16 %v136
    %v296 = vunpack.c.h.b16 %v136
    %v297 = vunpack.c.l.b16 %v137
    %v298 = vunpack.c.h.b16 %v137
    %v299 = vunpack.c.l.b16 %v138
    %v300 = vunpack.c.h.b16 %v138
    %v301 = vunpack.c.l.b16 %v139
    %v302 = vunpack.c.h.b16 %v139
    %v303 = vunpack.c.l.b16 %v140
    %v304 = vunpack.c.h.b16 %v140
    %v305 = vunpack.c.l.b16 %v141
    %v306 = vunpack.c.h.b16 %v141
    %v307 = vunpack.c.l.b16 %v142
    %v308 = vunpack.c.h.b16 %v142
    %v309 = vpack.c.b16 %v249, %v245
    %v310 = vpack.c.b16 %v250, %v246
    %v311 = vpack.c.b16 %v251, %v247
    %v312 = vpack.c.b16 %v252, %v248
    %v313 = vpack.c.b16 %v257, %v253
    %v314 = vpack.c.b16 %v258, %v254
    %v315 = vpack.c.b16 %v259, %v255
    %v316 = vpack.c.b16 %v260, %v256
    %v317 = vpack.c.b16 %v265, %v261
    %v318 = vpack.c.b16 %v266, %v262
    %v319 = vpack.c.b16 %v267, %v263
    %v320 = vpack.c.b16 %v268, %v264
    %v321 = vpack.c.b16 %v273, %v269
    %v322 = vpack.c.b16 %v274, %v270
    %v323 = vpack.c.b16 %v275, %v271
    %v324 = vpack.c.b16 %v276, %v272
    %v325 = vpack.c.b16 %v281, %v277
    %v326 = vpack.c.b16 %v282, %v278
    %v327 = vpack.c.b16 %v283, %v279
    %v328 = vpack.c.b16 %v284, %v280
    %v329 = vpack.c.b16 %v289, %v285
    %v330 = vpack.c.b16 %v290, %v286
    %v331 = vpack.c.b16 %v291, %v287
    %v332 = vpack.c.b16 %v292, %v288
    %v333 = vpack.c.b16 %v297, %v293
    %v334 = vpack.c.b16 %v298, %v294
    %v335 = vpack.c.b16 %v299, %v295
    %v336 = vpack.c.b16 %v300, %v296
    %v337 = vpack.c.b16 %v305, %v301
    %v338 = vpack.c.b16 %v306, %v302
    %v339 = vpack.c.b16 %v307, %v303
    %v340 = vpack.c.b16 %v308, %v304
    %373 = vmatprep.subr.bf16.mxu0 %v338
    %374 = vmatpush1.bf16.msra.mxu0 %v337
    %375 = vmatprep.subr.bf16.mxu0 %v334
    %376 = vmatpush1.bf16.msra.mxu0 %v333
    %377 = vmatprep.subr.bf16.mxu0 %v330
    %378 = vmatpush1.bf16.msra.mxu0 %v329
    %379 = vmatprep.subr.bf16.mxu0 %v326
    %380 = vmatpush1.bf16.msra.mxu0 %v325
    %381 = vmatprep.subr.bf16.mxu0 %v322
    %382 = vmatpush1.bf16.msra.mxu0 %v321
    %383 = vmatprep.subr.bf16.mxu0 %v318
    %384 = vmatpush1.bf16.msra.mxu0 %v317
    %385 = vmatprep.subr.bf16.mxu0 %v314
    %386 = vmatpush1.bf16.msra.mxu0 %v313
    %387 = vmatprep.subr.bf16.mxu0 %v310
    %388 = vmatpush1.bf16.msra.mxu0 %v309
    %389 = vmatprep.subr.bf16.mxu0 0
    %390 = vmatpush2.bf16.msra.mxu0 0
    %391 = vmatprep.subr.bf16.mxu0 0
    %392 = vmatpush2.bf16.msra.mxu0 0
    %393 = vmatprep.subr.bf16.mxu0 0
    %394 = vmatpush2.bf16.msra.mxu0 0
    %395 = vmatprep.subr.bf16.mxu0 0
    %396 = vmatpush2.bf16.msra.mxu0 0
    %397 = vmatprep.subr.bf16.mxu0 0
    %398 = vmatpush2.bf16.msra.mxu0 0
    %399 = vmatprep.subr.bf16.mxu0 0
    %400 = vmatpush2.bf16.msra.mxu0 0
    %401 = vmatprep.subr.bf16.mxu0 0
    %402 = vmatpush2.bf16.msra.mxu0 0
    %403 = vmatprep.subr.bf16.mxu0 0
    %404 = vmatpush2.bf16.msra.mxu0 0
    %405 = vmatprep.mubr.bf16.mxu0 0
    %406 = vmatmul.mubr.bf16.gmra.mxu0 %v197
    %v407 = vpop.f32.mrf.mxu0
    %v408 = vadd.f32 %v148, %v407
    %v409 = vpop.f32.mrf.mxu0
    %v410 = vadd.f32 %v152, %v409
    %v411 = vpop.f32.mrf.mxu0
    %v412 = vadd.f32 %v148, %v411
    %v413 = vpop.f32.mrf.mxu0
    %v414 = vadd.f32 %v152, %v413
    %415 = vmatprep.mubr.bf16.mxu0 0
    %416 = vmatmul.mubr.bf16.gmra.mxu0 %v198
    %v417 = vpop.f32.mrf.mxu0
    %v418 = vadd.f32 %v148, %v417
    %v419 = vpop.f32.mrf.mxu0
    %v420 = vadd.f32 %v152, %v419
    %v421 = vpop.f32.mrf.mxu0
    %v422 = vadd.f32 %v148, %v421
    %v423 = vpop.f32.mrf.mxu0
    %v424 = vadd.f32 %v152, %v423
    %425 = vmatprep.mubr.bf16.mxu0 0
    %426 = vmatmul.mubr.bf16.gmra.mxu0 %v199
    %v427 = vpop.f32.mrf.mxu0
    %v428 = vadd.f32 %v148, %v427
    %v429 = vpop.f32.mrf.mxu0
    %v430 = vadd.f32 %v152, %v429
    %v431 = vpop.f32.mrf.mxu0
    %v432 = vadd.f32 %v148, %v431
    %v433 = vpop.f32.mrf.mxu0
    %v434 = vadd.f32 %v152, %v433
    %435 = vmatprep.mubr.bf16.mxu0 0
    %436 = vmatmul.mubr.bf16.gmra.mxu0 %v200
    %v437 = vpop.f32.mrf.mxu0
    %v438 = vadd.f32 %v148, %v437
    %v439 = vpop.f32.mrf.mxu0
    %v440 = vadd.f32 %v152, %v439
    %v441 = vpop.f32.mrf.mxu0
    %v442 = vadd.f32 %v148, %v441
    %v443 = vpop.f32.mrf.mxu0
    %v444 = vadd.f32 %v152, %v443
    %445 = vmatprep.mubr.bf16.mxu0 0
    %446 = vmatmul.mubr.bf16.gmra.mxu0 %v201
    %v447 = vpop.f32.mrf.mxu0
    %v448 = vadd.f32 %v148, %v447
    %v449 = vpop.f32.mrf.mxu0
    %v450 = vadd.f32 %v152, %v449
    %v451 = vpop.f32.mrf.mxu0
    %v452 = vadd.f32 %v148, %v451
    %v453 = vpop.f32.mrf.mxu0
    %v454 = vadd.f32 %v152, %v453
    %455 = vmatprep.mubr.bf16.mxu0 0
    %456 = vmatmul.mubr.bf16.gmra.mxu0 %v202
    %v457 = vpop.f32.mrf.mxu0
    %v458 = vadd.f32 %v148, %v457
    %v459 = vpop.f32.mrf.mxu0
    %v460 = vadd.f32 %v152, %v459
    %v461 = vpop.f32.mrf.mxu0
    %v462 = vadd.f32 %v148, %v461
    %v463 = vpop.f32.mrf.mxu0
    %v464 = vadd.f32 %v152, %v463
    %465 = vmatprep.mubr.bf16.mxu0 0
    %466 = vmatmul.mubr.bf16.gmra.mxu0 %v203
    %v467 = vpop.f32.mrf.mxu0
    %v468 = vadd.f32 %v148, %v467
    %v469 = vpop.f32.mrf.mxu0
    %v470 = vadd.f32 %v152, %v469
    %v471 = vpop.f32.mrf.mxu0
    %v472 = vadd.f32 %v148, %v471
    %v473 = vpop.f32.mrf.mxu0
    %v474 = vadd.f32 %v152, %v473
    %475 = vmatprep.mubr.bf16.mxu0 0
    %476 = vmatmul.mubr.bf16.gmra.mxu0 %v204
    %v477 = vpop.f32.mrf.mxu0
    %v478 = vadd.f32 %v148, %v477
    %v479 = vpop.f32.mrf.mxu0
    %v480 = vadd.f32 %v152, %v479
    %v481 = vpop.f32.mrf.mxu0
    %v482 = vadd.f32 %v148, %v481
    %v483 = vpop.f32.mrf.mxu0
    %v484 = vadd.f32 %v152, %v483
    %485 = vdwg.mxu0
    %486 = vmatprep.subr.bf16.mxu0 %v340
    %487 = vmatpush1.bf16.msra.mxu0 %v339
    %488 = vmatprep.subr.bf16.mxu0 %v336
    %489 = vmatpush1.bf16.msra.mxu0 %v335
    %490 = vmatprep.subr.bf16.mxu0 %v332
    %491 = vmatpush1.bf16.msra.mxu0 %v331
    %492 = vmatprep.subr.bf16.mxu0 %v328
    %493 = vmatpush1.bf16.msra.mxu0 %v327
    %494 = vmatprep.subr.bf16.mxu0 %v324
    %495 = vmatpush1.bf16.msra.mxu0 %v323
    %496 = vmatprep.subr.bf16.mxu0 %v320
    %497 = vmatpush1.bf16.msra.mxu0 %v319
    %498 = vmatprep.subr.bf16.mxu0 %v316
    %499 = vmatpush1.bf16.msra.mxu0 %v315
    %500 = vmatprep.subr.bf16.mxu0 %v312
    %501 = vmatpush1.bf16.msra.mxu0 %v311
    %502 = vmatprep.subr.bf16.mxu0 0
    %503 = vmatpush2.bf16.msra.mxu0 0
    %504 = vmatprep.subr.bf16.mxu0 0
    %505 = vmatpush2.bf16.msra.mxu0 0
    %506 = vmatprep.subr.bf16.mxu0 0
    %507 = vmatpush2.bf16.msra.mxu0 0
    %508 = vmatprep.subr.bf16.mxu0 0
    %509 = vmatpush2.bf16.msra.mxu0 0
    %510 = vmatprep.subr.bf16.mxu0 0
    %511 = vmatpush2.bf16.msra.mxu0 0
    %512 = vmatprep.subr.bf16.mxu0 0
    %513 = vmatpush2.bf16.msra.mxu0 0
    %514 = vmatprep.subr.bf16.mxu0 0
    %515 = vmatpush2.bf16.msra.mxu0 0
    %516 = vmatprep.subr.bf16.mxu0 0
    %517 = vmatpush2.bf16.msra.mxu0 0
    %518 = vmatprep.mubr.bf16.mxu0 0
    %519 = vmatmul.mubr.bf16.gmra.mxu0 %v197
    %v520 = vpop.f32.mrf.mxu0
    %v521 = vadd.f32 %v156, %v520
    %v522 = vpop.f32.mrf.mxu0
    %v523 = vadd.f32 %v160, %v522
    %v524 = vpop.f32.mrf.mxu0
    %v525 = vadd.f32 %v156, %v524
    %v526 = vpop.f32.mrf.mxu0
    %v527 = vadd.f32 %v160, %v526
    %528 = vmatprep.mubr.bf16.mxu0 0
    %529 = vmatmul.mubr.bf16.gmra.mxu0 %v198
    %v530 = vpop.f32.mrf.mxu0
    %v531 = vadd.f32 %v156, %v530
    %v532 = vpop.f32.mrf.mxu0
    %v533 = vadd.f32 %v160, %v532
    %v534 = vpop.f32.mrf.mxu0
    %v535 = vadd.f32 %v156, %v534
    %v536 = vpop.f32.mrf.mxu0
    %v537 = vadd.f32 %v160, %v536
    %538 = vmatprep.mubr.bf16.mxu0 0
    %539 = vmatmul.mubr.bf16.gmra.mxu0 %v199
    %v540 = vpop.f32.mrf.mxu0
    %v541 = vadd.f32 %v156, %v540
    %v542 = vpop.f32.mrf.mxu0
    %v543 = vadd.f32 %v160, %v542
    %v544 = vpop.f32.mrf.mxu0
    %v545 = vadd.f32 %v156, %v544
    %v546 = vpop.f32.mrf.mxu0
    %v547 = vadd.f32 %v160, %v546
    %548 = vmatprep.mubr.bf16.mxu0 0
    %549 = vmatmul.mubr.bf16.gmra.mxu0 %v200
    %v550 = vpop.f32.mrf.mxu0
    %v551 = vadd.f32 %v156, %v550
    %v552 = vpop.f32.mrf.mxu0
    %v553 = vadd.f32 %v160, %v552
    %v554 = vpop.f32.mrf.mxu0
    %v555 = vadd.f32 %v156, %v554
    %v556 = vpop.f32.mrf.mxu0
    %v557 = vadd.f32 %v160, %v556
    %558 = vmatprep.mubr.bf16.mxu0 0
    %559 = vmatmul.mubr.bf16.gmra.mxu0 %v201
    %v560 = vpop.f32.mrf.mxu0
    %v561 = vadd.f32 %v156, %v560
    %v562 = vpop.f32.mrf.mxu0
    %v563 = vadd.f32 %v160, %v562
    %v564 = vpop.f32.mrf.mxu0
    %v565 = vadd.f32 %v156, %v564
    %v566 = vpop.f32.mrf.mxu0
    %v567 = vadd.f32 %v160, %v566
    %568 = vmatprep.mubr.bf16.mxu0 0
    %569 = vmatmul.mubr.bf16.gmra.mxu0 %v202
    %v570 = vpop.f32.mrf.mxu0
    %v571 = vadd.f32 %v156, %v570
    %v572 = vpop.f32.mrf.mxu0
    %v573 = vadd.f32 %v160, %v572
    %v574 = vpop.f32.mrf.mxu0
    %v575 = vadd.f32 %v156, %v574
    %v576 = vpop.f32.mrf.mxu0
    %v577 = vadd.f32 %v160, %v576
    %578 = vmatprep.mubr.bf16.mxu0 0
    %579 = vmatmul.mubr.bf16.gmra.mxu0 %v203
    %v580 = vpop.f32.mrf.mxu0
    %v581 = vadd.f32 %v156, %v580
    %v582 = vpop.f32.mrf.mxu0
    %v583 = vadd.f32 %v160, %v582
    %v584 = vpop.f32.mrf.mxu0
    %v585 = vadd.f32 %v156, %v584
    %v586 = vpop.f32.mrf.mxu0
    %v587 = vadd.f32 %v160, %v586
    %588 = vmatprep.mubr.bf16.mxu0 0
    %589 = vmatmul.mubr.bf16.gmra.mxu0 %v204
    %v590 = vpop.f32.mrf.mxu0
    %v591 = vadd.f32 %v156, %v590
    %v592 = vpop.f32.mrf.mxu0
    %v593 = vadd.f32 %v160, %v592
    %v594 = vpop.f32.mrf.mxu0
    %v595 = vadd.f32 %v156, %v594
    %v596 = vpop.f32.mrf.mxu0
    %v597 = vadd.f32 %v160, %v596
    %598 = vdwg.mxu0
    %v599 = vmul.f32 %v408, %v408
    %v600 = vmul.f32 %v410, %v410
    %v601 = vmul.f32 %v521, %v521
    %v602 = vmul.f32 %v523, %v523
    %v603 = vmul.f32 %v412, %v412
    %v604 = vmul.f32 %v414, %v414
    %v605 = vmul.f32 %v525, %v525
    %v606 = vmul.f32 %v527, %v527
    %v607 = vmul.f32 %v418, %v418
    %v608 = vmul.f32 %v420, %v420
    %v609 = vmul.f32 %v531, %v531
    %v610 = vmul.f32 %v533, %v533
    %v611 = vmul.f32 %v422, %v422
    %v612 = vmul.f32 %v424, %v424
    %v613 = vmul.f32 %v535, %v535
    %v614 = vmul.f32 %v537, %v537
    %v615 = vmul.f32 %v428, %v428
    %v616 = vmul.f32 %v430, %v430
    %v617 = vmul.f32 %v541, %v541
    %v618 = vmul.f32 %v543, %v543
    %v619 = vmul.f32 %v432, %v432
    %v620 = vmul.f32 %v434, %v434
    %v621 = vmul.f32 %v545, %v545
    %v622 = vmul.f32 %v547, %v547
    %v623 = vmul.f32 %v438, %v438
    %v624 = vmul.f32 %v440, %v440
    %v625 = vmul.f32 %v551, %v551
    %v626 = vmul.f32 %v553, %v553
    %v627 = vmul.f32 %v442, %v442
    %v628 = vmul.f32 %v444, %v444
    %v629 = vmul.f32 %v555, %v555
    %v630 = vmul.f32 %v557, %v557
    %v631 = vmul.f32 %v448, %v448
    %v632 = vmul.f32 %v450, %v450
    %v633 = vmul.f32 %v561, %v561
    %v634 = vmul.f32 %v563, %v563
    %v635 = vmul.f32 %v452, %v452
    %v636 = vmul.f32 %v454, %v454
    %v637 = vmul.f32 %v565, %v565
    %v638 = vmul.f32 %v567, %v567
    %v639 = vmul.f32 %v458, %v458
    %v640 = vmul.f32 %v460, %v460
    %v641 = vmul.f32 %v571, %v571
    %v642 = vmul.f32 %v573, %v573
    %v643 = vmul.f32 %v462, %v462
    %v644 = vmul.f32 %v464, %v464
    %v645 = vmul.f32 %v575, %v575
    %v646 = vmul.f32 %v577, %v577
    %v647 = vmul.f32 %v468, %v468
    %v648 = vmul.f32 %v470, %v470
    %v649 = vmul.f32 %v581, %v581
    %v650 = vmul.f32 %v583, %v583
    %v651 = vmul.f32 %v472, %v472
    %v652 = vmul.f32 %v474, %v474
    %v653 = vmul.f32 %v585, %v585
    %v654 = vmul.f32 %v587, %v587
    %v655 = vmul.f32 %v478, %v478
    %v656 = vmul.f32 %v480, %v480
    %v657 = vmul.f32 %v591, %v591
    %v658 = vmul.f32 %v593, %v593
    %v659 = vmul.f32 %v482, %v482
    %v660 = vmul.f32 %v484, %v484
    %v661 = vmul.f32 %v595, %v595
    %v662 = vmul.f32 %v597, %v597
    %v663 = vmul.f32 %v599, %v408
    %v664 = vmul.f32 %v600, %v410
    %v665 = vmul.f32 %v601, %v521
    %v666 = vmul.f32 %v602, %v523
    %v667 = vmul.f32 %v603, %v412
    %v668 = vmul.f32 %v604, %v414
    %v669 = vmul.f32 %v605, %v525
    %v670 = vmul.f32 %v606, %v527
    %v671 = vmul.f32 %v607, %v418
    %v672 = vmul.f32 %v608, %v420
    %v673 = vmul.f32 %v609, %v531
    %v674 = vmul.f32 %v610, %v533
    %v675 = vmul.f32 %v611, %v422
    %v676 = vmul.f32 %v612, %v424
    %v677 = vmul.f32 %v613, %v535
    %v678 = vmul.f32 %v614, %v537
    %v679 = vmul.f32 %v615, %v428
    %v680 = vmul.f32 %v616, %v430
    %v681 = vmul.f32 %v617, %v541
    %v682 = vmul.f32 %v618, %v543
    %v683 = vmul.f32 %v619, %v432
    %v684 = vmul.f32 %v620, %v434
    %v685 = vmul.f32 %v621, %v545
    %v686 = vmul.f32 %v622, %v547
    %v687 = vmul.f32 %v623, %v438
    %v688 = vmul.f32 %v624, %v440
    %v689 = vmul.f32 %v625, %v551
    %v690 = vmul.f32 %v626, %v553
    %v691 = vmul.f32 %v627, %v442
    %v692 = vmul.f32 %v628, %v444
    %v693 = vmul.f32 %v629, %v555
    %v694 = vmul.f32 %v630, %v557
    %v695 = vmul.f32 %v631, %v448
    %v696 = vmul.f32 %v632, %v450
    %v697 = vmul.f32 %v633, %v561
    %v698 = vmul.f32 %v634, %v563
    %v699 = vmul.f32 %v635, %v452
    %v700 = vmul.f32 %v636, %v454
    %v701 = vmul.f32 %v637, %v565
    %v702 = vmul.f32 %v638, %v567
    %v703 = vmul.f32 %v639, %v458
    %v704 = vmul.f32 %v640, %v460
    %v705 = vmul.f32 %v641, %v571
    %v706 = vmul.f32 %v642, %v573
    %v707 = vmul.f32 %v643, %v462
    %v708 = vmul.f32 %v644, %v464
    %v709 = vmul.f32 %v645, %v575
    %v710 = vmul.f32 %v646, %v577
    %v711 = vmul.f32 %v647, %v468
    %v712 = vmul.f32 %v648, %v470
    %v713 = vmul.f32 %v649, %v581
    %v714 = vmul.f32 %v650, %v583
    %v715 = vmul.f32 %v651, %v472
    %v716 = vmul.f32 %v652, %v474
    %v717 = vmul.f32 %v653, %v585
    %v718 = vmul.f32 %v654, %v587
    %v719 = vmul.f32 %v655, %v478
    %v720 = vmul.f32 %v656, %v480
    %v721 = vmul.f32 %v657, %v591
    %v722 = vmul.f32 %v658, %v593
    %v723 = vmul.f32 %v659, %v482
    %v724 = vmul.f32 %v660, %v484
    %v725 = vmul.f32 %v661, %v595
    %v726 = vmul.f32 %v662, %v597
    %v727 = vmul.f32 %v408, 0.5
    %v728 = vmul.f32 %v410, 0.5
    %v729 = vmul.f32 %v521, 0.5
    %v730 = vmul.f32 %v523, 0.5
    %v731 = vmul.f32 %v412, 0.5
    %v732 = vmul.f32 %v414, 0.5
    %v733 = vmul.f32 %v525, 0.5
    %v734 = vmul.f32 %v527, 0.5
    %v735 = vmul.f32 %v418, 0.5
    %v736 = vmul.f32 %v420, 0.5
    %v737 = vmul.f32 %v531, 0.5
    %v738 = vmul.f32 %v533, 0.5
    %v739 = vmul.f32 %v422, 0.5
    %v740 = vmul.f32 %v424, 0.5
    %v741 = vmul.f32 %v535, 0.5
    %v742 = vmul.f32 %v537, 0.5
    %v743 = vmul.f32 %v428, 0.5
    %v744 = vmul.f32 %v430, 0.5
    %v745 = vmul.f32 %v541, 0.5
    %v746 = vmul.f32 %v543, 0.5
    %v747 = vmul.f32 %v432, 0.5
    %v748 = vmul.f32 %v434, 0.5
    %v749 = vmul.f32 %v545, 0.5
    %v750 = vmul.f32 %v547, 0.5
    %v751 = vmul.f32 %v438, 0.5
    %v752 = vmul.f32 %v440, 0.5
    %v753 = vmul.f32 %v551, 0.5
    %v754 = vmul.f32 %v553, 0.5
    %v755 = vmul.f32 %v442, 0.5
    %v756 = vmul.f32 %v444, 0.5
    %v757 = vmul.f32 %v555, 0.5
    %v758 = vmul.f32 %v557, 0.5
    %v759 = vmul.f32 %v448, 0.5
    %v760 = vmul.f32 %v450, 0.5
    %v761 = vmul.f32 %v561, 0.5
    %v762 = vmul.f32 %v563, 0.5
    %v763 = vmul.f32 %v452, 0.5
    %v764 = vmul.f32 %v454, 0.5
    %v765 = vmul.f32 %v565, 0.5
    %v766 = vmul.f32 %v567, 0.5
    %v767 = vmul.f32 %v458, 0.5
    %v768 = vmul.f32 %v460, 0.5
    %v769 = vmul.f32 %v571, 0.5
    %v770 = vmul.f32 %v573, 0.5
    %v771 = vmul.f32 %v462, 0.5
    %v772 = vmul.f32 %v464, 0.5
    %v773 = vmul.f32 %v575, 0.5
    %v774 = vmul.f32 %v577, 0.5
    %v775 = vmul.f32 %v468, 0.5
    %v776 = vmul.f32 %v470, 0.5
    %v777 = vmul.f32 %v581, 0.5
    %v778 = vmul.f32 %v583, 0.5
    %v779 = vmul.f32 %v472, 0.5
    %v780 = vmul.f32 %v474, 0.5
    %v781 = vmul.f32 %v585, 0.5
    %v782 = vmul.f32 %v587, 0.5
    %v783 = vmul.f32 %v478, 0.5
    %v784 = vmul.f32 %v480, 0.5
    %v785 = vmul.f32 %v591, 0.5
    %v786 = vmul.f32 %v593, 0.5
    %v787 = vmul.f32 %v482, 0.5
    %v788 = vmul.f32 %v484, 0.5
    %v789 = vmul.f32 %v595, 0.5
    %v790 = vmul.f32 %v597, 0.5
    %v791 = vmul.f32 %v663, 0.044715
    %v792 = vmul.f32 %v664, 0.044715
    %v793 = vmul.f32 %v665, 0.044715
    %v794 = vmul.f32 %v666, 0.044715
    %v795 = vmul.f32 %v667, 0.044715
    %v796 = vmul.f32 %v668, 0.044715
    %v797 = vmul.f32 %v669, 0.044715
    %v798 = vmul.f32 %v670, 0.044715
    %v799 = vmul.f32 %v671, 0.044715
    %v800 = vmul.f32 %v672, 0.044715
    %v801 = vmul.f32 %v673, 0.044715
    %v802 = vmul.f32 %v674, 0.044715
    %v803 = vmul.f32 %v675, 0.044715
    %v804 = vmul.f32 %v676, 0.044715
    %v805 = vmul.f32 %v677, 0.044715
    %v806 = vmul.f32 %v678, 0.044715
    %v807 = vmul.f32 %v679, 0.044715
    %v808 = vmul.f32 %v680, 0.044715
    %v809 = vmul.f32 %v681, 0.044715
    %v810 = vmul.f32 %v682, 0.044715
    %v811 = vmul.f32 %v683, 0.044715
    %v812 = vmul.f32 %v684, 0.044715
    %v813 = vmul.f32 %v685, 0.044715
    %v814 = vmul.f32 %v686, 0.044715
    %v815 = vmul.f32 %v687, 0.044715
    %v816 = vmul.f32 %v688, 0.044715
    %v817 = vmul.f32 %v689, 0.044715
    %v818 = vmul.f32 %v690, 0.044715
    %v819 = vmul.f32 %v691, 0.044715
    %v820 = vmul.f32 %v692, 0.044715
    %v821 = vmul.f32 %v693, 0.044715
    %v822 = vmul.f32 %v694, 0.044715
    %v823 = vmul.f32 %v695, 0.044715
    %v824 = vmul.f32 %v696, 0.044715
    %v825 = vmul.f32 %v697, 0.044715
    %v826 = vmul.f32 %v698, 0.044715
    %v827 = vmul.f32 %v699, 0.044715
    %v828 = vmul.f32 %v700, 0.044715
    %v829 = vmul.f32 %v701, 0.044715
    %v830 = vmul.f32 %v702, 0.044715
    %v831 = vmul.f32 %v703, 0.044715
    %v832 = vmul.f32 %v704, 0.044715
    %v833 = vmul.f32 %v705, 0.044715
    %v834 = vmul.f32 %v706, 0.044715
    %v835 = vmul.f32 %v707, 0.044715
    %v836 = vmul.f32 %v708, 0.044715
    %v837 = vmul.f32 %v709, 0.044715
    %v838 = vmul.f32 %v710, 0.044715
    %v839 = vmul.f32 %v711, 0.044715
    %v840 = vmul.f32 %v712, 0.044715
    %v841 = vmul.f32 %v713, 0.044715
    %v842 = vmul.f32 %v714, 0.044715
    %v843 = vmul.f32 %v715, 0.044715
    %v844 = vmul.f32 %v716, 0.044715
    %v845 = vmul.f32 %v717, 0.044715
    %v846 = vmul.f32 %v718, 0.044715
    %v847 = vmul.f32 %v719, 0.044715
    %v848 = vmul.f32 %v720, 0.044715
    %v849 = vmul.f32 %v721, 0.044715
    %v850 = vmul.f32 %v722, 0.044715
    %v851 = vmul.f32 %v723, 0.044715
    %v852 = vmul.f32 %v724, 0.044715
    %v853 = vmul.f32 %v725, 0.044715
    %v854 = vmul.f32 %v726, 0.044715
    %v855 = vadd.f32 %v408, %v791
    %v856 = vadd.f32 %v410, %v792
    %v857 = vadd.f32 %v521, %v793
    %v858 = vadd.f32 %v523, %v794
    %v859 = vadd.f32 %v412, %v795
    %v860 = vadd.f32 %v414, %v796
    %v861 = vadd.f32 %v525, %v797
    %v862 = vadd.f32 %v527, %v798
    %v863 = vadd.f32 %v418, %v799
    %v864 = vadd.f32 %v420, %v800
    %v865 = vadd.f32 %v531, %v801
    %v866 = vadd.f32 %v533, %v802
    %v867 = vadd.f32 %v422, %v803
    %v868 = vadd.f32 %v424, %v804
    %v869 = vadd.f32 %v535, %v805
    %v870 = vadd.f32 %v537, %v806
    %v871 = vadd.f32 %v428, %v807
    %v872 = vadd.f32 %v430, %v808
    %v873 = vadd.f32 %v541, %v809
    %v874 = vadd.f32 %v543, %v810
    %v875 = vadd.f32 %v432, %v811
    %v876 = vadd.f32 %v434, %v812
    %v877 = vadd.f32 %v545, %v813
    %v878 = vadd.f32 %v547, %v814
    %v879 = vadd.f32 %v438, %v815
    %v880 = vadd.f32 %v440, %v816
    %v881 = vadd.f32 %v551, %v817
    %v882 = vadd.f32 %v553, %v818
    %v883 = vadd.f32 %v442, %v819
    %v884 = vadd.f32 %v444, %v820
    %v885 = vadd.f32 %v555, %v821
    %v886 = vadd.f32 %v557, %v822
    %v887 = vadd.f32 %v448, %v823
    %v888 = vadd.f32 %v450, %v824
    %v889 = vadd.f32 %v561, %v825
    %v890 = vadd.f32 %v563, %v826
    %v891 = vadd.f32 %v452, %v827
    %v892 = vadd.f32 %v454, %v828
    %v893 = vadd.f32 %v565, %v829
    %v894 = vadd.f32 %v567, %v830
    %v895 = vadd.f32 %v458, %v831
    %v896 = vadd.f32 %v460, %v832
    %v897 = vadd.f32 %v571, %v833
    %v898 = vadd.f32 %v573, %v834
    %v899 = vadd.f32 %v462, %v835
    %v900 = vadd.f32 %v464, %v836
    %v901 = vadd.f32 %v575, %v837
    %v902 = vadd.f32 %v577, %v838
    %v903 = vadd.f32 %v468, %v839
    %v904 = vadd.f32 %v470, %v840
    %v905 = vadd.f32 %v581, %v841
    %v906 = vadd.f32 %v583, %v842
    %v907 = vadd.f32 %v472, %v843
    %v908 = vadd.f32 %v474, %v844
    %v909 = vadd.f32 %v585, %v845
    %v910 = vadd.f32 %v587, %v846
    %v911 = vadd.f32 %v478, %v847
    %v912 = vadd.f32 %v480, %v848
    %v913 = vadd.f32 %v591, %v849
    %v914 = vadd.f32 %v593, %v850
    %v915 = vadd.f32 %v482, %v851
    %v916 = vadd.f32 %v484, %v852
    %v917 = vadd.f32 %v595, %v853
    %v918 = vadd.f32 %v597, %v854
    %v919 = vmul.f32 %v855, 0.7978846
    %v920 = vmul.f32 %v856, 0.7978846
    %v921 = vmul.f32 %v857, 0.7978846
    %v922 = vmul.f32 %v858, 0.7978846
    %v923 = vmul.f32 %v859, 0.7978846
    %v924 = vmul.f32 %v860, 0.7978846
    %v925 = vmul.f32 %v861, 0.7978846
    %v926 = vmul.f32 %v862, 0.7978846
    %v927 = vmul.f32 %v863, 0.7978846
    %v928 = vmul.f32 %v864, 0.7978846
    %v929 = vmul.f32 %v865, 0.7978846
    %v930 = vmul.f32 %v866, 0.7978846
    %v931 = vmul.f32 %v867, 0.7978846
    %v932 = vmul.f32 %v868, 0.7978846
    %v933 = vmul.f32 %v869, 0.7978846
    %v934 = vmul.f32 %v870, 0.7978846
    %v935 = vmul.f32 %v871, 0.7978846
    %v936 = vmul.f32 %v872, 0.7978846
    %v937 = vmul.f32 %v873, 0.7978846
    %v938 = vmul.f32 %v874, 0.7978846
    %v939 = vmul.f32 %v875, 0.7978846
    %v940 = vmul.f32 %v876, 0.7978846
    %v941 = vmul.f32 %v877, 0.7978846
    %v942 = vmul.f32 %v878, 0.7978846
    %v943 = vmul.f32 %v879, 0.7978846
    %v944 = vmul.f32 %v880, 0.7978846
    %v945 = vmul.f32 %v881, 0.7978846
    %v946 = vmul.f32 %v882, 0.7978846
    %v947 = vmul.f32 %v883, 0.7978846
    %v948 = vmul.f32 %v884, 0.7978846
    %v949 = vmul.f32 %v885, 0.7978846
    %v950 = vmul.f32 %v886, 0.7978846
    %v951 = vmul.f32 %v887, 0.7978846
    %v952 = vmul.f32 %v888, 0.7978846
    %v953 = vmul.f32 %v889, 0.7978846
    %v954 = vmul.f32 %v890, 0.7978846
    %v955 = vmul.f32 %v891, 0.7978846
    %v956 = vmul.f32 %v892, 0.7978846
    %v957 = vmul.f32 %v893, 0.7978846
    %v958 = vmul.f32 %v894, 0.7978846
    %v959 = vmul.f32 %v895, 0.7978846
    %v960 = vmul.f32 %v896, 0.7978846
    %v961 = vmul.f32 %v897, 0.7978846
    %v962 = vmul.f32 %v898, 0.7978846
    %v963 = vmul.f32 %v899, 0.7978846
    %v964 = vmul.f32 %v900, 0.7978846
    %v965 = vmul.f32 %v901, 0.7978846
    %v966 = vmul.f32 %v902, 0.7978846
    %v967 = vmul.f32 %v903, 0.7978846
    %v968 = vmul.f32 %v904, 0.7978846
    %v969 = vmul.f32 %v905, 0.7978846
    %v970 = vmul.f32 %v906, 0.7978846
    %v971 = vmul.f32 %v907, 0.7978846
    %v972 = vmul.f32 %v908, 0.7978846
    %v973 = vmul.f32 %v909, 0.7978846
    %v974 = vmul.f32 %v910, 0.7978846
    %v975 = vmul.f32 %v911, 0.7978846
    %v976 = vmul.f32 %v912, 0.7978846
    %v977 = vmul.f32 %v913, 0.7978846
    %v978 = vmul.f32 %v914, 0.7978846
    %v979 = vmul.f32 %v915, 0.7978846
    %v980 = vmul.f32 %v916, 0.7978846
    %v981 = vmul.f32 %v917, 0.7978846
    %v982 = vmul.f32 %v918, 0.7978846
    %v983 = vtanh.pop %v919
    %v984 = vtanh.pop %v920
    %v985 = vtanh.pop %v921
    %v986 = vtanh.pop %v922
    %v987 = vtanh.pop %v923
    %v988 = vtanh.pop %v924
    %v989 = vtanh.pop %v925
    %v990 = vtanh.pop %v926
    %v991 = vtanh.pop %v927
    %v992 = vtanh.pop %v928
    %v993 = vtanh.pop %v929
    %v994 = vtanh.pop %v930
    %v995 = vtanh.pop %v931
    %v996 = vtanh.pop %v932
    %v997 = vtanh.pop %v933
    %v998 = vtanh.pop %v934
    %v999 = vtanh.pop %v935
    %v1000 = vtanh.pop %v936
    %v1001 = vtanh.pop %v937
    %v1002 = vtanh.pop %v938
    %v1003 = vtanh.pop %v939
    %v1004 = vtanh.pop %v940
    %v1005 = vtanh.pop %v941
    %v1006 = vtanh.pop %v942
    %v1007 = vtanh.pop %v943
    %v1008 = vtanh.pop %v944
    %v1009 = vtanh.pop %v945
    %v1010 = vtanh.pop %v946
    %v1011 = vtanh.pop %v947
    %v1012 = vtanh.pop %v948
    %v1013 = vtanh.pop %v949
    %v1014 = vtanh.pop %v950
    %v1015 = vtanh.pop %v951
    %v1016 = vtanh.pop %v952
    %v1017 = vtanh.pop %v953
    %v1018 = vtanh.pop %v954
    %v1019 = vtanh.pop %v955
    %v1020 = vtanh.pop %v956
    %v1021 = vtanh.pop %v957
    %v1022 = vtanh.pop %v958
    %v1023 = vtanh.pop %v959
    %v1024 = vtanh.pop %v960
    %v1025 = vtanh.pop %v961
    %v1026 = vtanh.pop %v962
    %v1027 = vtanh.pop %v963
    %v1028 = vtanh.pop %v964
    %v1029 = vtanh.pop %v965
    %v1030 = vtanh.pop %v966
    %v1031 = vtanh.pop %v967
    %v1032 = vtanh.pop %v968
    %v1033 = vtanh.pop %v969
    %v1034 = vtanh.pop %v970
    %v1035 = vtanh.pop %v971
    %v1036 = vtanh.pop %v972
    %v1037 = vtanh.pop %v973
    %v1038 = vtanh.pop %v974
    %v1039 = vtanh.pop %v975
    %v1040 = vtanh.pop %v976
    %v1041 = vtanh.pop %v977
    %v1042 = vtanh.pop %v978
    %v1043 = vtanh.pop %v979
    %v1044 = vtanh.pop %v980
    %v1045 = vtanh.pop %v981
    %v1046 = vtanh.pop %v982
    %v1047 = vadd.f32 %v983, 1.0
    %v1048 = vadd.f32 %v984, 1.0
    %v1049 = vadd.f32 %v985, 1.0
    %v1050 = vadd.f32 %v986, 1.0
    %v1051 = vadd.f32 %v987, 1.0
    %v1052 = vadd.f32 %v988, 1.0
    %v1053 = vadd.f32 %v989, 1.0
    %v1054 = vadd.f32 %v990, 1.0
    %v1055 = vadd.f32 %v991, 1.0
    %v1056 = vadd.f32 %v992, 1.0
    %v1057 = vadd.f32 %v993, 1.0
    %v1058 = vadd.f32 %v994, 1.0
    %v1059 = vadd.f32 %v995, 1.0
    %v1060 = vadd.f32 %v996, 1.0
    %v1061 = vadd.f32 %v997, 1.0
    %v1062 = vadd.f32 %v998, 1.0
    %v1063 = vadd.f32 %v999, 1.0
    %v1064 = vadd.f32 %v1000, 1.0
    %v1065 = vadd.f32 %v1001, 1.0
    %v1066 = vadd.f32 %v1002, 1.0
    %v1067 = vadd.f32 %v1003, 1.0
    %v1068 = vadd.f32 %v1004, 1.0
    %v1069 = vadd.f32 %v1005, 1.0
    %v1070 = vadd.f32 %v1006, 1.0
    %v1071 = vadd.f32 %v1007, 1.0
    %v1072 = vadd.f32 %v1008, 1.0
    %v1073 = vadd.f32 %v1009, 1.0
    %v1074 = vadd.f32 %v1010, 1.0
    %v1075 = vadd.f32 %v1011, 1.0
    %v1076 = vadd.f32 %v1012, 1.0
    %v1077 = vadd.f32 %v1013, 1.0
    %v1078 = vadd.f32 %v1014, 1.0
    %v1079 = vadd.f32 %v1015, 1.0
    %v1080 = vadd.f32 %v1016, 1.0
    %v1081 = vadd.f32 %v1017, 1.0
    %v1082 = vadd.f32 %v1018, 1.0
    %v1083 = vadd.f32 %v1019, 1.0
    %v1084 = vadd.f32 %v1020, 1.0
    %v1085 = vadd.f32 %v1021, 1.0
    %v1086 = vadd.f32 %v1022, 1.0
    %v1087 = vadd.f32 %v1023, 1.0
    %v1088 = vadd.f32 %v1024, 1.0
    %v1089 = vadd.f32 %v1025, 1.0
    %v1090 = vadd.f32 %v1026, 1.0
    %v1091 = vadd.f32 %v1027, 1.0
    %v1092 = vadd.f32 %v1028, 1.0
    %v1093 = vadd.f32 %v1029, 1.0
    %v1094 = vadd.f32 %v1030, 1.0
    %v1095 = vadd.f32 %v1031, 1.0
    %v1096 = vadd.f32 %v1032, 1.0
    %v1097 = vadd.f32 %v1033, 1.0
    %v1098 = vadd.f32 %v1034, 1.0
    %v1099 = vadd.f32 %v1035, 1.0
    %v1100 = vadd.f32 %v1036, 1.0
    %v1101 = vadd.f32 %v1037, 1.0
    %v1102 = vadd.f32 %v1038, 1.0
    %v1103 = vadd.f32 %v1039, 1.0
    %v1104 = vadd.f32 %v1040, 1.0
    %v1105 = vadd.f32 %v1041, 1.0
    %v1106 = vadd.f32 %v1042, 1.0
    %v1107 = vadd.f32 %v1043, 1.0
    %v1108 = vadd.f32 %v1044, 1.0
    %v1109 = vadd.f32 %v1045, 1.0
    %v1110 = vadd.f32 %v1046, 1.0
    %v1111 = vmul.f32 %v727, %v1047
    %v1112 = vmul.f32 %v728, %v1048
    %v1113 = vmul.f32 %v729, %v1049
    %v1114 = vmul.f32 %v730, %v1050
    %v1115 = vmul.f32 %v731, %v1051
    %v1116 = vmul.f32 %v732, %v1052
    %v1117 = vmul.f32 %v733, %v1053
    %v1118 = vmul.f32 %v734, %v1054
    %v1119 = vmul.f32 %v735, %v1055
    %v1120 = vmul.f32 %v736, %v1056
    %v1121 = vmul.f32 %v737, %v1057
    %v1122 = vmul.f32 %v738, %v1058
    %v1123 = vmul.f32 %v739, %v1059
    %v1124 = vmul.f32 %v740, %v1060
    %v1125 = vmul.f32 %v741, %v1061
    %v1126 = vmul.f32 %v742, %v1062
    %v1127 = vmul.f32 %v743, %v1063
    %v1128 = vmul.f32 %v744, %v1064
    %v1129 = vmul.f32 %v745, %v1065
    %v1130 = vmul.f32 %v746, %v1066
    %v1131 = vmul.f32 %v747, %v1067
    %v1132 = vmul.f32 %v748, %v1068
    %v1133 = vmul.f32 %v749, %v1069
    %v1134 = vmul.f32 %v750, %v1070
    %v1135 = vmul.f32 %v751, %v1071
    %v1136 = vmul.f32 %v752, %v1072
    %v1137 = vmul.f32 %v753, %v1073
    %v1138 = vmul.f32 %v754, %v1074
    %v1139 = vmul.f32 %v755, %v1075
    %v1140 = vmul.f32 %v756, %v1076
    %v1141 = vmul.f32 %v757, %v1077
    %v1142 = vmul.f32 %v758, %v1078
    %v1143 = vmul.f32 %v759, %v1079
    %v1144 = vmul.f32 %v760, %v1080
    %v1145 = vmul.f32 %v761, %v1081
    %v1146 = vmul.f32 %v762, %v1082
    %v1147 = vmul.f32 %v763, %v1083
    %v1148 = vmul.f32 %v764, %v1084
    %v1149 = vmul.f32 %v765, %v1085
    %v1150 = vmul.f32 %v766, %v1086
    %v1151 = vmul.f32 %v767, %v1087
    %v1152 = vmul.f32 %v768, %v1088
    %v1153 = vmul.f32 %v769, %v1089
    %v1154 = vmul.f32 %v770, %v1090
    %v1155 = vmul.f32 %v771, %v1091
    %v1156 = vmul.f32 %v772, %v1092
    %v1157 = vmul.f32 %v773, %v1093
    %v1158 = vmul.f32 %v774, %v1094
    %v1159 = vmul.f32 %v775, %v1095
    %v1160 = vmul.f32 %v776, %v1096
    %v1161 = vmul.f32 %v777, %v1097
    %v1162 = vmul.f32 %v778, %v1098
    %v1163 = vmul.f32 %v779, %v1099
    %v1164 = vmul.f32 %v780, %v1100
    %v1165 = vmul.f32 %v781, %v1101
    %v1166 = vmul.f32 %v782, %v1102
    %v1167 = vmul.f32 %v783, %v1103
    %v1168 = vmul.f32 %v784, %v1104
    %v1169 = vmul.f32 %v785, %v1105
    %v1170 = vmul.f32 %v786, %v1106
    %v1171 = vmul.f32 %v787, %v1107
    %v1172 = vmul.f32 %v788, %v1108
    %v1173 = vmul.f32 %v789, %v1109
    %v1174 = vmul.f32 %v790, %v1110
    %v1175 = vld [vmem:[#allocation2] sm:$0xff]
    %v1176 = vld [vmem:[#allocation2 + $0x8] sm:$0xff]
    %v1177 = vld [vmem:[#allocation2 + $0x10] sm:$0xff]
    %v1178 = vld [vmem:[#allocation2 + $0x18] sm:$0xff]
    %v1179 = vld [vmem:[#allocation2 + $0x20] sm:$0xff]
    %v1180 = vld [vmem:[#allocation2 + $0x28] sm:$0xff]
    %v1181 = vld [vmem:[#allocation2 + $0x30] sm:$0xff]
    %v1182 = vld [vmem:[#allocation2 + $0x38] sm:$0xff]
    %v1183 = vld [vmem:[#allocation2 + $0x40] sm:$0xff]
    %v1184 = vld [vmem:[#allocation2 + $0x48] sm:$0xff]
    %v1185 = vld [vmem:[#allocation2 + $0x50] sm:$0xff]
    %v1186 = vld [vmem:[#allocation2 + $0x58] sm:$0xff]
    %v1187 = vld [vmem:[#allocation2 + $0x60] sm:$0xff]
    %v1188 = vld [vmem:[#allocation2 + $0x68] sm:$0xff]
    %v1189 = vld [vmem:[#allocation2 + $0x70] sm:$0xff]
    %v1190 = vld [vmem:[#allocation2 + $0x78] sm:$0xff]
    %v1191 = vpack.c.bf16 %v1115, %v1111
    %v1192 = vpack.c.bf16 %v1116, %v1112
    %v1193 = vpack.c.bf16 %v1117, %v1113
    %v1194 = vpack.c.bf16 %v1118, %v1114
    %v1195 = vpack.c.bf16 %v1123, %v1119
    %v1196 = vpack.c.bf16 %v1124, %v1120
    %v1197 = vpack.c.bf16 %v1125, %v1121
    %v1198 = vpack.c.bf16 %v1126, %v1122
    %v1199 = vpack.c.bf16 %v1131, %v1127
    %v1200 = vpack.c.bf16 %v1132, %v1128
    %v1201 = vpack.c.bf16 %v1133, %v1129
    %v1202 = vpack.c.bf16 %v1134, %v1130
    %v1203 = vpack.c.bf16 %v1139, %v1135
    %v1204 = vpack.c.bf16 %v1140, %v1136
    %v1205 = vpack.c.bf16 %v1141, %v1137
    %v1206 = vpack.c.bf16 %v1142, %v1138
    %v1207 = vpack.c.bf16 %v1147, %v1143
    %v1208 = vpack.c.bf16 %v1148, %v1144
    %v1209 = vpack.c.bf16 %v1149, %v1145
    %v1210 = vpack.c.bf16 %v1150, %v1146
    %v1211 = vpack.c.bf16 %v1155, %v1151
    %v1212 = vpack.c.bf16 %v1156, %v1152
    %v1213 = vpack.c.bf16 %v1157, %v1153
    %v1214 = vpack.c.bf16 %v1158, %v1154
    %v1215 = vpack.c.bf16 %v1163, %v1159
    %v1216 = vpack.c.bf16 %v1164, %v1160
    %v1217 = vpack.c.bf16 %v1165, %v1161
    %v1218 = vpack.c.bf16 %v1166, %v1162
    %v1219 = vpack.c.bf16 %v1171, %v1167
    %v1220 = vpack.c.bf16 %v1172, %v1168
    %v1221 = vpack.c.bf16 %v1173, %v1169
    %v1222 = vpack.c.bf16 %v1174, %v1170
    %v1223 = vld [vmem:[#allocation9] sm:$0xf]
    %v1224 = vld [vmem:[#allocation9 + $0x4] sm:$0xf]
    %v1225 = vld [vmem:[#allocation9 + $0x8] sm:$0xf]
    %v1226 = vld [vmem:[#allocation9 + $0xc] sm:$0xf]
    %v1227 = vld [vmem:[#allocation9 + $0x10] sm:$0xf]
    %v1228 = vld [vmem:[#allocation9 + $0x14] sm:$0xf]
    %v1229 = vld [vmem:[#allocation9 + $0x18] sm:$0xf]
    %v1230 = vld [vmem:[#allocation9 + $0x1c] sm:$0xf]
    %v1231 = vld [vmem:[#allocation9 + $0x20] sm:$0xf]
    %v1232 = vld [vmem:[#allocation9 + $0x24] sm:$0xf]
    %v1233 = vld [vmem:[#allocation9 + $0x28] sm:$0xf]
    %v1234 = vld [vmem:[#allocation9 + $0x2c] sm:$0xf]
    %v1235 = vld [vmem:[#allocation9 + $0x30] sm:$0xf]
    %v1236 = vld [vmem:[#allocation9 + $0x34] sm:$0xf]
    %v1237 = vld [vmem:[#allocation9 + $0x38] sm:$0xf]
    %v1238 = vld [vmem:[#allocation9 + $0x3c] sm:$0xf]
    %v1239 = vld [vmem:[#allocation9 + $0x40] sm:$0xf]
    %v1240 = vld [vmem:[#allocation9 + $0x44] sm:$0xf]
    %v1241 = vld [vmem:[#allocation9 + $0x48] sm:$0xf]
    %v1242 = vld [vmem:[#allocation9 + $0x4c] sm:$0xf]
    %v1243 = vld [vmem:[#allocation9 + $0x50] sm:$0xf]
    %v1244 = vld [vmem:[#allocation9 + $0x54] sm:$0xf]
    %v1245 = vld [vmem:[#allocation9 + $0x58] sm:$0xf]
    %v1246 = vld [vmem:[#allocation9 + $0x5c] sm:$0xf]
    %v1247 = vld [vmem:[#allocation9 + $0x60] sm:$0xf]
    %v1248 = vld [vmem:[#allocation9 + $0x64] sm:$0xf]
    %v1249 = vld [vmem:[#allocation9 + $0x68] sm:$0xf]
    %v1250 = vld [vmem:[#allocation9 + $0x6c] sm:$0xf]
    %v1251 = vld [vmem:[#allocation9 + $0x70] sm:$0xf]
    %v1252 = vld [vmem:[#allocation9 + $0x74] sm:$0xf]
    %v1253 = vld [vmem:[#allocation9 + $0x78] sm:$0xf]
    %v1254 = vld [vmem:[#allocation9 + $0x7c] sm:$0xf]
    %v1255 = vld [vmem:[#allocation9 + $0x80] sm:$0xf]
    %v1256 = vld [vmem:[#allocation9 + $0x84] sm:$0xf]
    %v1257 = vld [vmem:[#allocation9 + $0x88] sm:$0xf]
    %v1258 = vld [vmem:[#allocation9 + $0x8c] sm:$0xf]
    %v1259 = vld [vmem:[#allocation9 + $0x90] sm:$0xf]
    %v1260 = vld [vmem:[#allocation9 + $0x94] sm:$0xf]
    %v1261 = vld [vmem:[#allocation9 + $0x98] sm:$0xf]
    %v1262 = vld [vmem:[#allocation9 + $0x9c] sm:$0xf]
    %v1263 = vld [vmem:[#allocation9 + $0xa0] sm:$0xf]
    %v1264 = vld [vmem:[#allocation9 + $0xa4] sm:$0xf]
    %v1265 = vld [vmem:[#allocation9 + $0xa8] sm:$0xf]
    %v1266 = vld [vmem:[#allocation9 + $0xac] sm:$0xf]
    %v1267 = vld [vmem:[#allocation9 + $0xb0] sm:$0xf]
    %v1268 = vld [vmem:[#allocation9 + $0xb4] sm:$0xf]
    %v1269 = vld [vmem:[#allocation9 + $0xb8] sm:$0xf]
    %v1270 = vld [vmem:[#allocation9 + $0xbc] sm:$0xf]
    %v1271 = vld [vmem:[#allocation9 + $0xc0] sm:$0xf]
    %v1272 = vld [vmem:[#allocation9 + $0xc4] sm:$0xf]
    %v1273 = vld [vmem:[#allocation9 + $0xc8] sm:$0xf]
    %v1274 = vld [vmem:[#allocation9 + $0xcc] sm:$0xf]
    %v1275 = vld [vmem:[#allocation9 + $0xd0] sm:$0xf]
    %v1276 = vld [vmem:[#allocation9 + $0xd4] sm:$0xf]
    %v1277 = vld [vmem:[#allocation9 + $0xd8] sm:$0xf]
    %v1278 = vld [vmem:[#allocation9 + $0xdc] sm:$0xf]
    %v1279 = vld [vmem:[#allocation9 + $0xe0] sm:$0xf]
    %v1280 = vld [vmem:[#allocation9 + $0xe4] sm:$0xf]
    %v1281 = vld [vmem:[#allocation9 + $0xe8] sm:$0xf]
    %v1282 = vld [vmem:[#allocation9 + $0xec] sm:$0xf]
    %v1283 = vld [vmem:[#allocation9 + $0xf0] sm:$0xf]
    %v1284 = vld [vmem:[#allocation9 + $0xf4] sm:$0xf]
    %v1285 = vld [vmem:[#allocation9 + $0xf8] sm:$0xf]
    %v1286 = vld [vmem:[#allocation9 + $0xfc] sm:$0xf]
    %v1351 = vunpack.c.l.b16 %v1223
    %v1352 = vunpack.c.l.b16 %v1224
    %v1353 = vunpack.c.l.b16 %v1225
    %v1354 = vunpack.c.l.b16 %v1226
    %v1355 = vunpack.c.l.b16 %v1227
    %v1356 = vunpack.c.l.b16 %v1228
    %v1357 = vunpack.c.l.b16 %v1229
    %v1358 = vunpack.c.l.b16 %v1230
    %v1359 = vunpack.c.l.b16 %v1231
    %v1360 = vunpack.c.l.b16 %v1232
    %v1361 = vunpack.c.l.b16 %v1233
    %v1362 = vunpack.c.l.b16 %v1234
    %v1363 = vunpack.c.l.b16 %v1235
    %v1364 = vunpack.c.l.b16 %v1236
    %v1365 = vunpack.c.l.b16 %v1237
    %v1366 = vunpack.c.l.b16 %v1238
    %v1367 = vunpack.c.l.b16 %v1239
    %v1368 = vunpack.c.l.b16 %v1240
    %v1369 = vunpack.c.l.b16 %v1241
    %v1370 = vunpack.c.l.b16 %v1242
    %v1371 = vunpack.c.l.b16 %v1243
    %v1372 = vunpack.c.l.b16 %v1244
    %v1373 = vunpack.c.l.b16 %v1245
    %v1374 = vunpack.c.l.b16 %v1246
    %v1375 = vunpack.c.l.b16 %v1247
    %v1376 = vunpack.c.l.b16 %v1248
    %v1377 = vunpack.c.l.b16 %v1249
    %v1378 = vunpack.c.l.b16 %v1250
    %v1379 = vunpack.c.l.b16 %v1251
    %v1380 = vunpack.c.l.b16 %v1252
    %v1381 = vunpack.c.l.b16 %v1253
    %v1382 = vunpack.c.l.b16 %v1254
    %v1383 = vunpack.c.l.b16 %v1255
    %v1384 = vunpack.c.l.b16 %v1256
    %v1385 = vunpack.c.l.b16 %v1257
    %v1386 = vunpack.c.l.b16 %v1258
    %v1387 = vunpack.c.l.b16 %v1259
    %v1388 = vunpack.c.l.b16 %v1260
    %v1389 = vunpack.c.l.b16 %v1261
    %v1390 = vunpack.c.l.b16 %v1262
    %v1391 = vunpack.c.l.b16 %v1263
    %v1392 = vunpack.c.l.b16 %v1264
    %v1393 = vunpack.c.l.b16 %v1265
    %v1394 = vunpack.c.l.b16 %v1266
    %v1395 = vunpack.c.l.b16 %v1267
    %v1396 = vunpack.c.l.b16 %v1268
    %v1397 = vunpack.c.l.b16 %v1269
    %v1398 = vunpack.c.l.b16 %v1270
    %v1399 = vunpack.c.l.b16 %v1271
    %v1400 = vunpack.c.l.b16 %v1272
    %v1401 = vunpack.c.l.b16 %v1273
    %v1402 = vunpack.c.l.b16 %v1274
    %v1403 = vunpack.c.l.b16 %v1275
    %v1404 = vunpack.c.l.b16 %v1276
    %v1405 = vunpack.c.l.b16 %v1277
    %v1406 = vunpack.c.l.b16 %v1278
    %v1407 = vunpack.c.l.b16 %v1279
    %v1408 = vunpack.c.l.b16 %v1280
    %v1409 = vunpack.c.l.b16 %v1281
    %v1410 = vunpack.c.l.b16 %v1282
    %v1411 = vunpack.c.l.b16 %v1283
    %v1412 = vunpack.c.l.b16 %v1284
    %v1413 = vunpack.c.l.b16 %v1285
    %v1414 = vunpack.c.l.b16 %v1286
    %v1415 = vpack.c.b16 %v1352, %v1351
    %v1416 = vpack.c.b16 %v1354, %v1353
    %v1417 = vpack.c.b16 %v1356, %v1355
    %v1418 = vpack.c.b16 %v1358, %v1357
    %v1419 = vpack.c.b16 %v1360, %v1359
    %v1420 = vpack.c.b16 %v1362, %v1361
    %v1421 = vpack.c.b16 %v1364, %v1363
    %v1422 = vpack.c.b16 %v1366, %v1365
    %v1423 = vpack.c.b16 %v1368, %v1367
    %v1424 = vpack.c.b16 %v1370, %v1369
    %v1425 = vpack.c.b16 %v1372, %v1371
    %v1426 = vpack.c.b16 %v1374, %v1373
    %v1427 = vpack.c.b16 %v1376, %v1375
    %v1428 = vpack.c.b16 %v1378, %v1377
    %v1429 = vpack.c.b16 %v1380, %v1379
    %v1430 = vpack.c.b16 %v1382, %v1381
    %v1431 = vpack.c.b16 %v1384, %v1383
    %v1432 = vpack.c.b16 %v1386, %v1385
    %v1433 = vpack.c.b16 %v1388, %v1387
    %v1434 = vpack.c.b16 %v1390, %v1389
    %v1435 = vpack.c.b16 %v1392, %v1391
    %v1436 = vpack.c.b16 %v1394, %v1393
    %v1437 = vpack.c.b16 %v1396, %v1395
    %v1438 = vpack.c.b16 %v1398, %v1397
    %v1439 = vpack.c.b16 %v1400, %v1399
    %v1440 = vpack.c.b16 %v1402, %v1401
    %v1441 = vpack.c.b16 %v1404, %v1403
    %v1442 = vpack.c.b16 %v1406, %v1405
    %v1443 = vpack.c.b16 %v1408, %v1407
    %v1444 = vpack.c.b16 %v1410, %v1409
    %v1445 = vpack.c.b16 %v1412, %v1411
    %v1446 = vpack.c.b16 %v1414, %v1413
    %1479 = vmatprep.subr.bf16.mxu0 0
    %1480 = vmatpush1.bf16.msra.mxu0 %v1422
    %1481 = vmatprep.subr.bf16.mxu0 0
    %1482 = vmatpush1.bf16.msra.mxu0 %v1421
    %1483 = vmatprep.subr.bf16.mxu0 0
    %1484 = vmatpush1.bf16.msra.mxu0 %v1420
    %1485 = vmatprep.subr.bf16.mxu0 0
    %1486 = vmatpush1.bf16.msra.mxu0 %v1419
    %1487 = vmatprep.subr.bf16.mxu0 0
    %1488 = vmatpush1.bf16.msra.mxu0 %v1418
    %1489 = vmatprep.subr.bf16.mxu0 0
    %1490 = vmatpush1.bf16.msra.mxu0 %v1417
    %1491 = vmatprep.subr.bf16.mxu0 0
    %1492 = vmatpush1.bf16.msra.mxu0 %v1416
    %1493 = vmatprep.subr.bf16.mxu0 0
    %1494 = vmatpush1.bf16.msra.mxu0 %v1415
    %1495 = vmatprep.subr.bf16.mxu0 0
    %1496 = vmatpush2.bf16.msra.mxu0 %v1430
    %1497 = vmatprep.subr.bf16.mxu0 0
    %1498 = vmatpush2.bf16.msra.mxu0 %v1429
    %1499 = vmatprep.subr.bf16.mxu0 0
    %1500 = vmatpush2.bf16.msra.mxu0 %v1428
    %1501 = vmatprep.subr.bf16.mxu0 0
    %1502 = vmatpush2.bf16.msra.mxu0 %v1427
    %1503 = vmatprep.subr.bf16.mxu0 0
    %1504 = vmatpush2.bf16.msra.mxu0 %v1426
    %1505 = vmatprep.subr.bf16.mxu0 0
    %1506 = vmatpush2.bf16.msra.mxu0 %v1425
    %1507 = vmatprep.subr.bf16.mxu0 0
    %1508 = vmatpush2.bf16.msra.mxu0 %v1424
    %1509 = vmatprep.subr.bf16.mxu0 0
    %1510 = vmatpush2.bf16.msra.mxu0 %v1423
    %1511 = vmatprep.mubr.bf16.mxu0 %v1192
    %1512 = vmatmul.mubr.bf16.gmra.mxu0 %v1191
    %v1513 = vpop.f32.mrf.mxu0
    %v1514 = vadd.f32 0.0, %v1513
    %v1515 = vpop.f32.mrf.mxu0
    %v1516 = vpop.f32.mrf.mxu0
    %v1517 = vadd.f32 0.0, %v1516
    %v1518 = vpop.f32.mrf.mxu0
    %1519 = vmatprep.mubr.bf16.mxu0 %v1196
    %1520 = vmatmul.mubr.bf16.gmra.mxu0 %v1195
    %v1521 = vpop.f32.mrf.mxu0
    %v1522 = vadd.f32 0.0, %v1521
    %v1523 = vpop.f32.mrf.mxu0
    %v1524 = vpop.f32.mrf.mxu0
    %v1525 = vadd.f32 0.0, %v1524
    %v1526 = vpop.f32.mrf.mxu0
    %1527 = vmatprep.mubr.bf16.mxu0 %v1200
    %1528 = vmatmul.mubr.bf16.gmra.mxu0 %v1199
    %v1529 = vpop.f32.mrf.mxu0
    %v1530 = vadd.f32 0.0, %v1529
    %v1531 = vpop.f32.mrf.mxu0
    %v1532 = vpop.f32.mrf.mxu0
    %v1533 = vadd.f32 0.0, %v1532
    %v1534 = vpop.f32.mrf.mxu0
    %1535 = vmatprep.mubr.bf16.mxu0 %v1204
    %1536 = vmatmul.mubr.bf16.gmra.mxu0 %v1203
    %v1537 = vpop.f32.mrf.mxu0
    %v1538 = vadd.f32 0.0, %v1537
    %v1539 = vpop.f32.mrf.mxu0
    %v1540 = vpop.f32.mrf.mxu0
    %v1541 = vadd.f32 0.0, %v1540
    %v1542 = vpop.f32.mrf.mxu0
    %1543 = vmatprep.mubr.bf16.mxu0 %v1208
    %1544 = vmatmul.mubr.bf16.gmra.mxu0 %v1207
    %v1545 = vpop.f32.mrf.mxu0
    %v1546 = vadd.f32 0.0, %v1545
    %v1547 = vpop.f32.mrf.mxu0
    %v1548 = vpop.f32.mrf.mxu0
    %v1549 = vadd.f32 0.0, %v1548
    %v1550 = vpop.f32.mrf.mxu0
    %1551 = vmatprep.mubr.bf16.mxu0 %v1212
    %1552 = vmatmul.mubr.bf16.gmra.mxu0 %v1211
    %v1553 = vpop.f32.mrf.mxu0
    %v1554 = vadd.f32 0.0, %v1553
    %v1555 = vpop.f32.mrf.mxu0
    %v1556 = vpop.f32.mrf.mxu0
    %v1557 = vadd.f32 0.0, %v1556
    %v1558 = vpop.f32.mrf.mxu0
    %1559 = vmatprep.mubr.bf16.mxu0 %v1216
    %1560 = vmatmul.mubr.bf16.gmra.mxu0 %v1215
    %v1561 = vpop.f32.mrf.mxu0
    %v1562 = vadd.f32 0.0, %v1561
    %v1563 = vpop.f32.mrf.mxu0
    %v1564 = vpop.f32.mrf.mxu0
    %v1565 = vadd.f32 0.0, %v1564
    %v1566 = vpop.f32.mrf.mxu0
    %1567 = vmatprep.mubr.bf16.mxu0 %v1220
    %1568 = vmatmul.mubr.bf16.gmra.mxu0 %v1219
    %v1569 = vpop.f32.mrf.mxu0
    %v1570 = vadd.f32 0.0, %v1569
    %v1571 = vpop.f32.mrf.mxu0
    %v1572 = vpop.f32.mrf.mxu0
    %v1573 = vadd.f32 0.0, %v1572
    %v1574 = vpop.f32.mrf.mxu0
    %1575 = vdwg.mxu0
    %1576 = vmatprep.subr.bf16.mxu0 0
    %1577 = vmatpush1.bf16.msra.mxu0 %v1438
    %1578 = vmatprep.subr.bf16.mxu0 0
    %1579 = vmatpush1.bf16.msra.mxu0 %v1437
    %1580 = vmatprep.subr.bf16.mxu0 0
    %1581 = vmatpush1.bf16.msra.mxu0 %v1436
    %1582 = vmatprep.subr.bf16.mxu0 0
    %1583 = vmatpush1.bf16.msra.mxu0 %v1435
    %1584 = vmatprep.subr.bf16.mxu0 0
    %1585 = vmatpush1.bf16.msra.mxu0 %v1434
    %1586 = vmatprep.subr.bf16.mxu0 0
    %1587 = vmatpush1.bf16.msra.mxu0 %v1433
    %1588 = vmatprep.subr.bf16.mxu0 0
    %1589 = vmatpush1.bf16.msra.mxu0 %v1432
    %1590 = vmatprep.subr.bf16.mxu0 0
    %1591 = vmatpush1.bf16.msra.mxu0 %v1431
    %1592 = vmatprep.subr.bf16.mxu0 0
    %1593 = vmatpush2.bf16.msra.mxu0 %v1446
    %1594 = vmatprep.subr.bf16.mxu0 0
    %1595 = vmatpush2.bf16.msra.mxu0 %v1445
    %1596 = vmatprep.subr.bf16.mxu0 0
    %1597 = vmatpush2.bf16.msra.mxu0 %v1444
    %1598 = vmatprep.subr.bf16.mxu0 0
    %1599 = vmatpush2.bf16.msra.mxu0 %v1443
    %1600 = vmatprep.subr.bf16.mxu0 0
    %1601 = vmatpush2.bf16.msra.mxu0 %v1442
    %1602 = vmatprep.subr.bf16.mxu0 0
    %1603 = vmatpush2.bf16.msra.mxu0 %v1441
    %1604 = vmatprep.subr.bf16.mxu0 0
    %1605 = vmatpush2.bf16.msra.mxu0 %v1440
    %1606 = vmatprep.subr.bf16.mxu0 0
    %1607 = vmatpush2.bf16.msra.mxu0 %v1439
    %1608 = vmatprep.mubr.bf16.mxu0 %v1194
    %1609 = vmatmul.mubr.bf16.gmra.mxu0 %v1193
    %v1610 = vpop.f32.mrf.mxu0
    %v1611 = vadd.f32 %v1514, %v1610
    %v1612 = vpop.f32.mrf.mxu0
    %v1613 = vpop.f32.mrf.mxu0
    %v1614 = vadd.f32 %v1517, %v1613
    %v1615 = vpop.f32.mrf.mxu0
    %1616 = vmatprep.mubr.bf16.mxu0 %v1198
    %1617 = vmatmul.mubr.bf16.gmra.mxu0 %v1197
    %v1618 = vpop.f32.mrf.mxu0
    %v1619 = vadd.f32 %v1522, %v1618
    %v1620 = vpop.f32.mrf.mxu0
    %v1621 = vpop.f32.mrf.mxu0
    %v1622 = vadd.f32 %v1525, %v1621
    %v1623 = vpop.f32.mrf.mxu0
    %1624 = vmatprep.mubr.bf16.mxu0 %v1202
    %1625 = vmatmul.mubr.bf16.gmra.mxu0 %v1201
    %v1626 = vpop.f32.mrf.mxu0
    %v1627 = vadd.f32 %v1530, %v1626
    %v1628 = vpop.f32.mrf.mxu0
    %v1629 = vpop.f32.mrf.mxu0
    %v1630 = vadd.f32 %v1533, %v1629
    %v1631 = vpop.f32.mrf.mxu0
    %1632 = vmatprep.mubr.bf16.mxu0 %v1206
    %1633 = vmatmul.mubr.bf16.gmra.mxu0 %v1205
    %v1634 = vpop.f32.mrf.mxu0
    %v1635 = vadd.f32 %v1538, %v1634
    %v1636 = vpop.f32.mrf.mxu0
    %v1637 = vpop.f32.mrf.mxu0
    %v1638 = vadd.f32 %v1541, %v1637
    %v1639 = vpop.f32.mrf.mxu0
    %1640 = vmatprep.mubr.bf16.mxu0 %v1210
    %1641 = vmatmul.mubr.bf16.gmra.mxu0 %v1209
    %v1642 = vpop.f32.mrf.mxu0
    %v1643 = vadd.f32 %v1546, %v1642
    %v1644 = vpop.f32.mrf.mxu0
    %v1645 = vpop.f32.mrf.mxu0
    %v1646 = vadd.f32 %v1549, %v1645
    %v1647 = vpop.f32.mrf.mxu0
    %1648 = vmatprep.mubr.bf16.mxu0 %v1214
    %1649 = vmatmul.mubr.bf16.gmra.mxu0 %v1213
    %v1650 = vpop.f32.mrf.mxu0
    %v1651 = vadd.f32 %v1554, %v1650
    %v1652 = vpop.f32.mrf.mxu0
    %v1653 = vpop.f32.mrf.mxu0
    %v1654 = vadd.f32 %v1557, %v1653
    %v1655 = vpop.f32.mrf.mxu0
    %1656 = vmatprep.mubr.bf16.mxu0 %v1218
    %1657 = vmatmul.mubr.bf16.gmra.mxu0 %v1217
    %v1658 = vpop.f32.mrf.mxu0
    %v1659 = vadd.f32 %v1562, %v1658
    %v1660 = vpop.f32.mrf.mxu0
    %v1661 = vpop.f32.mrf.mxu0
    %v1662 = vadd.f32 %v1565, %v1661
    %v1663 = vpop.f32.mrf.mxu0
    %1664 = vmatprep.mubr.bf16.mxu0 %v1222
    %1665 = vmatmul.mubr.bf16.gmra.mxu0 %v1221
    %v1666 = vpop.f32.mrf.mxu0
    %v1667 = vadd.f32 %v1570, %v1666
    %v1668 = vpop.f32.mrf.mxu0
    %v1669 = vpop.f32.mrf.mxu0
    %v1670 = vadd.f32 %v1573, %v1669
    %v1671 = vpop.f32.mrf.mxu0
    %1672 = vdwg.mxu0
    %v1673 = vadd.f32 %v1175, %v1611
    %v1674 = vadd.f32 %v1176, %v1614
    %v1675 = vadd.f32 %v1177, %v1619
    %v1676 = vadd.f32 %v1178, %v1622
    %v1677 = vadd.f32 %v1179, %v1627
    %v1678 = vadd.f32 %v1180, %v1630
    %v1679 = vadd.f32 %v1181, %v1635
    %v1680 = vadd.f32 %v1182, %v1638
    %v1681 = vadd.f32 %v1183, %v1643
    %v1682 = vadd.f32 %v1184, %v1646
    %v1683 = vadd.f32 %v1185, %v1651
    %v1684 = vadd.f32 %v1186, %v1654
    %v1685 = vadd.f32 %v1187, %v1659
    %v1686 = vadd.f32 %v1188, %v1662
    %v1687 = vadd.f32 %v1189, %v1667
    %v1688 = vadd.f32 %v1190, %v1670
    %1689 = vst [vmem:[#allocation2] sm:$0xff] %v1673
    %1690 = vst [vmem:[#allocation2 + $0x8] sm:$0xff] %v1674
    %1691 = vst [vmem:[#allocation2 + $0x10] sm:$0xff] %v1675
    %1692 = vst [vmem:[#allocation2 + $0x18] sm:$0xff] %v1676
    %1693 = vst [vmem:[#allocation2 + $0x20] sm:$0xff] %v1677
    %1694 = vst [vmem:[#allocation2 + $0x28] sm:$0xff] %v1678
    %1695 = vst [vmem:[#allocation2 + $0x30] sm:$0xff] %v1679
    %1696 = vst [vmem:[#allocation2 + $0x38] sm:$0xff] %v1680
    %1697 = vst [vmem:[#allocation2 + $0x40] sm:$0xff] %v1681
    %1698 = vst [vmem:[#allocation2 + $0x48] sm:$0xff] %v1682
    %1699 = vst [vmem:[#allocation2 + $0x50] sm:$0xff] %v1683
    %1700 = vst [vmem:[#allocation2 + $0x58] sm:$0xff] %v1684
    %1701 = vst [vmem:[#allocation2 + $0x60] sm:$0xff] %v1685
    %1702 = vst [vmem:[#allocation2 + $0x68] sm:$0xff] %v1686
    %1703 = vst [vmem:[#allocation2 + $0x70] sm:$0xff] %v1687
    %1704 = vst [vmem:[#allocation2 + $0x78] sm:$0xff] %v1688
    // Predicated region
    $region42: #{tpu_custom_call.1} parent=1 // pred_check
      %p1705 = pneg %p75
    $region43: #{tpu_custom_call.1} parent=1 // pred_check_branch
      %1707 = sbr.rel (%p1705) target = $region45
    $region44: #{tpu_custom_call.1} parent=1 // pred_region
      %v1708 = vld [vmem:[#allocation2] sm:$0xff]
      %v1709 = vld [vmem:[#allocation2 + $0x8] sm:$0xff]
      %v1710 = vld [vmem:[#allocation2 + $0x10] sm:$0xff]
      %v1711 = vld [vmem:[#allocation2 + $0x18] sm:$0xff]
      %v1712 = vld [vmem:[#allocation2 + $0x20] sm:$0xff]
      %v1713 = vld [vmem:[#allocation2 + $0x28] sm:$0xff]
      %v1714 = vld [vmem:[#allocation2 + $0x30] sm:$0xff]
      %v1715 = vld [vmem:[#allocation2 + $0x38] sm:$0xff]
      %v1716 = vld [vmem:[#allocation2 + $0x40] sm:$0xff]
      %v1717 = vld [vmem:[#allocation2 + $0x48] sm:$0xff]
      %v1718 = vld [vmem:[#allocation2 + $0x50] sm:$0xff]
      %v1719 = vld [vmem:[#allocation2 + $0x58] sm:$0xff]
      %v1720 = vld [vmem:[#allocation2 + $0x60] sm:$0xff]
      %v1721 = vld [vmem:[#allocation2 + $0x68] sm:$0xff]
      %v1722 = vld [vmem:[#allocation2 + $0x70] sm:$0xff]
      %v1723 = vld [vmem:[#allocation2 + $0x78] sm:$0xff]
      %v1724 = vld [vmem:[%s4] sm:$0x1]
      %v1726 = vlaneseq
      %v1727 = vshrl.u32 %v1726, 7
      %v1728 = vsub.s32 0, %v1727
      %v1729 = vrot.slane %v1724, %v1728
      %v1731 = vadd.f32 %v1708, %v1729
      %v1732 = vadd.f32 %v1709, %v1729
      %v1733 = vadd.f32 %v1710, %v1729
      %v1734 = vadd.f32 %v1711, %v1729
      %v1735 = vadd.f32 %v1712, %v1729
      %v1736 = vadd.f32 %v1713, %v1729
      %v1737 = vadd.f32 %v1714, %v1729
      %v1738 = vadd.f32 %v1715, %v1729
      %v1739 = vadd.f32 %v1716, %v1729
      %v1740 = vadd.f32 %v1717, %v1729
      %v1741 = vadd.f32 %v1718, %v1729
      %v1742 = vadd.f32 %v1719, %v1729
      %v1743 = vadd.f32 %v1720, %v1729
      %v1744 = vadd.f32 %v1721, %v1729
      %v1745 = vadd.f32 %v1722, %v1729
      %v1746 = vadd.f32 %v1723, %v1729
      %1747 = vst [vmem:[#allocation11] sm:$0xff] %v1731
      %1748 = vst [vmem:[#allocation11 + $0x8] sm:$0xff] %v1732
      %1749 = vst [vmem:[#allocation11 + $0x10] sm:$0xff] %v1733
      %1750 = vst [vmem:[#allocation11 + $0x18] sm:$0xff] %v1734
      %1751 = vst [vmem:[#allocation11 + $0x20] sm:$0xff] %v1735
      %1752 = vst [vmem:[#allocation11 + $0x28] sm:$0xff] %v1736
      %1753 = vst [vmem:[#allocation11 + $0x30] sm:$0xff] %v1737
      %1754 = vst [vmem:[#allocation11 + $0x38] sm:$0xff] %v1738
      %1755 = vst [vmem:[#allocation11 + $0x40] sm:$0xff] %v1739
      %1756 = vst [vmem:[#allocation11 + $0x48] sm:$0xff] %v1740
      %1757 = vst [vmem:[#allocation11 + $0x50] sm:$0xff] %v1741
      %1758 = vst [vmem:[#allocation11 + $0x58] sm:$0xff] %v1742
      %1759 = vst [vmem:[#allocation11 + $0x60] sm:$0xff] %v1743
      %1760 = vst [vmem:[#allocation11 + $0x68] sm:$0xff] %v1744
      %1761 = vst [vmem:[#allocation11 + $0x70] sm:$0xff] %v1745
      %1762 = vst [vmem:[#allocation11 + $0x78] sm:$0xff] %v1746
    $region45: #{tpu_custom_call.1} parent=1 // pred_fallthru
      _
    // Predicated region
    $region46: #{tpu_custom_call.1} parent=1 // pred_check
      _
    $region47: #{tpu_custom_call.1} parent=1 // pred_check_branch
      %1764 = sbr.rel (0) target = $region49
    $region48: #{tpu_custom_call.1} parent=1 // pred_region
      %s1766 = ssub.s32 2048, 2048
      %1767 = vsyncadd [#allocation5], %s1766
      %s1768 = sshll.u32 [#allocation11], 4
      %s1769 = int_to_ptr.vmem [resolvable:$true] %s1768
      %1774 = dma.vmem_to_hbm [thread:$0]  %s1769, 2048, %s5, [#allocation5], 128, 128, 8
    $region49: #{tpu_custom_call.1} parent=1 // pred_fallthru
      _
    // Predicated region
    $region50: #{tpu_custom_call.1} parent=1 // pred_check
      _
    $region51: #{tpu_custom_call.1} parent=1 // pred_check_branch
      %1776 = sbr.rel (0) target = $region53
    $region52: #{tpu_custom_call.1} parent=1 // pred_region
      %1777 = dma.done [#allocation5], 2048
    $region53: #{tpu_custom_call.1} parent=1 // pred_fallthru
      _
    %1778 = vsyncpa [#allocation4], 1
    %1779 = vsyncpa [#allocation7], 1
    %1780 = vsyncpa [#allocation10], 1
    %1781 = vsyncpa [#allocation5], 1

</llo_original>
